<compile_context>
chip_gen: v6e
topology: v6e:2x2x1
jax: 0.10.0
libtpu: 0.0.40
codegen_flags: <defaults>
</compile_context>

<pallas_src>
import jax
import jax.numpy as jnp
from jax import lax
from jax.experimental import pallas as pl
from jax.experimental.pallas import tpu as pltpu


# Row indices inside the packed 1-D parameter buffer (biases, LayerNorm
# vectors, the fused wf|wr bias, and the ft scalar).
(_B_GC1B, _B_GC2B, _B_NORMA, _B_NORMB, _B_WOB, _B_N1A, _B_N1B,
 _B_OTRB, _B_N2A, _B_N2B, _B_WFRB, _B_WUB, _B_FT) = range(13)
_NUM_PACK_ROWS = 13


# ------------------------------- kernel ------------------------------------
def _make_kernel(mm_dtype):
    def kernel(
        # batched inputs (block leading dim = Bt)
        enc_ref, attn_ref, s_ref, ww_ref, wem_ref, wop_ref, smask_ref,
        # shared weights / parameters
        gc1_w_ref, gc2_w_ref, wo_w_ref, otr_wa_ref, ops_rep_ref,
        ops_half_ref, wfr_ww_ref, wfr_op_ref, wu_w_ref, bias_ref,
        # outputs
        op_o_ref, wo_out_ref,
    ):
        f32 = jnp.float32

        def mm(a, b):
            # 2-D matmul on the MXU, f32 accumulation.
            return jnp.dot(a.astype(mm_dtype), b.astype(mm_dtype),
                           preferred_element_type=f32)

        def bmm(a, b):
            # standard batched matmul (batch leading on both operands).
            return jnp.einsum('bij,bjk->bik', a.astype(mm_dtype),
                              b.astype(mm_dtype), preferred_element_type=f32)

        def brow(row, width):
            # (1, width) slice of the packed parameter buffer.
            return bias_ref[row:row + 1, :width]

        def ln1(x, a, b, eps=1e-6):
            # LayerNorm1: std = sqrt(sum((x - mean)^2))  (NOT divided by D)
            mean = jnp.mean(x, axis=-1, keepdims=True)
            d = x - mean
            std = jnp.sqrt(jnp.sum(d * d, axis=-1, keepdims=True))
            return a * d / (std + eps) + b

        enc = enc_ref[...]                              # (Bt, S, H)
        Bt, S, H = enc.shape
        H2 = 2 * H
        wop = wop_ref[...]                              # (Bt, S, O)
        O = wop.shape[-1]

        # ---- build w_all in-kernel (saves a (B,S,2H) HBM round trip) -------
        s2w = attn_ref[...] * s_ref[...]                # (Bt,S,1)*(Bt,1,H)->(Bt,S,H)
        w_all = jnp.concatenate([s2w, enc], axis=-1)    # (Bt, S, 2H)

        # ---------------- word-word GCN (batch folded into M) ---------------
        ww_adj = jnp.where(wem_ref[...] == 1.0, ww_ref[...], 0.0)    # (Bt,S,S)
        sup1 = mm(w_all.reshape(Bt * S, H2), gc1_w_ref[...]).reshape(Bt, S, H)
        h1 = jax.nn.relu(bmm(ww_adj, sup1) + brow(_B_GC1B, H))
        # dropout: identity (eval mode)
        sup2 = mm(h1.reshape(Bt * S, H), gc2_w_ref[...]).reshape(Bt, S, H2)
        gcn = bmm(ww_adj, sup2) + brow(_B_GC2B, H2)
        w2w = ln1(gcn, brow(_B_NORMA, H2), brow(_B_NORMB, H2)) + w_all

        # ---------------- word -> op aggregation (no transposes) ------------
        wo_m = jnp.where(smask_ref[...] != 0.0, 0.0, wop)            # (Bt,S,O)
        col = jnp.sum(wo_m, axis=1, keepdims=True)                    # (Bt,1,O)
        wo_adj = wo_m * pl.reciprocal(col + 1e-30, approx=False)      # (Bt,S,O)
        # agg rows are o-major: row index = o*Bt + b  ->  (O*Bt, 2H)
        agg2 = jnp.concatenate(
            [jnp.sum(wo_adj[:, :, o:o + 1] * w2w, axis=1) for o in range(O)],
            axis=0)

        # ---------------- op branch: pure 2-D, M = O*Bt, no broadcasts -------
        op_t = jax.nn.relu(mm(agg2, wo_w_ref[...]) + brow(_B_WOB, H))
        # dropout: identity (eval mode)
        op_t = ln1(op_t, brow(_B_N1A, H), brow(_B_N1B, H))            # (O*Bt,H)
        # o_trans over cat([op_trans, ops], -1) == split-weight matmul sum;
        # the ops-half is precomputed in the wrapper (ops_half_ref).
        op_h = jax.nn.relu(mm(op_t, otr_wa_ref[...]) + ops_half_ref[...]
                           + brow(_B_OTRB, H2))
        op_o2 = ln1(op_h, brow(_B_N2A, H2), brow(_B_N2B, H2)) + ops_rep_ref[...]

        # ---------------- update_graph ---------------------------------------
        word_output = w2w * lax.rsqrt(
            jnp.sum(w2w * w2w, axis=-1, keepdims=True) + 1e-12)       # (Bt,S,2H)
        op_n2 = op_o2 * lax.rsqrt(
            jnp.sum(op_o2 * op_o2, axis=-1, keepdims=True) + 1e-12)   # (O*Bt,2H)

        # lane-dense flats: lane block o holds the (b, o) row -> matches
        # torch's op.reshape(O, -1) row-major order, and doubles as the
        # lane-dense op_o output slab.
        opn_flat = jnp.concatenate(
            [op_n2[o * Bt:(o + 1) * Bt, :] for o in range(O)], axis=-1)
        opo_flat = jnp.concatenate(
            [op_o2[o * Bt:(o + 1) * Bt, :] for o in range(O)], axis=-1)

        # fused forget|rel projection: one (2H,2O) and one (O*2H,2O) matmul.
        wflat = word_output.reshape(Bt * S, H2)
        fr = (mm(wflat, wfr_ww_ref[...]).reshape(Bt, S, 2 * O)
              + mm(opn_flat, wfr_op_ref[...])[:, None, :]
              + brow(_B_WFRB, 2 * O))                                  # (Bt,S,2O)
        ft = bias_ref[_B_FT:_B_FT + 1, 0:1]                            # (1,1)
        forget = jnp.maximum(jax.nn.sigmoid(fr[..., :O]), ft)          # (Bt,S,O)
        rel = fr[..., O:]                                              # (Bt,S,O)

        # fused update: single matmul of cat([word_op, rel], -1) @ wu_w
        upd_in = jnp.concatenate([wop, rel], axis=-1)                  # (Bt,S,2O)
        upd_logits = jax.nn.relu(
            mm(upd_in.reshape(Bt * S, 2 * O), wu_w_ref[...]).reshape(Bt, S, O)
            + brow(_B_WUB, O))
        mmax = jnp.max(upd_logits, axis=-1, keepdims=True)
        e = jnp.exp(upd_logits - mmax)
        updated = e * pl.reciprocal(jnp.sum(e, axis=-1, keepdims=True),
                                    approx=True)                       # softmax

        op_o_ref[0] = opo_flat                                         # lane-dense
        wo_out_ref[...] = forget * wop + (1.0 - forget) * updated

    return kernel


# ------------------------------ wrapper -------------------------------------
def hgcn_pallas(params, encoder_outputs, ops, s, current_attn,
                word_word, word_op, word_exist_mat, seq_mask,
                ft=0.99, batch_block=8, matmul_dtype=jnp.float32):
    f32 = jnp.float32
    B, S, H = encoder_outputs.shape
    O = ops.shape[0]
    H2 = 2 * H

    # --- batch chunking: guarantee >= 2 grid steps when B >= 2 so v7x's two
    #     TensorCores both get work; otherwise fold as much batch as allowed
    #     into M for the weight-side matmuls.
    Bt = max(1, min(batch_block, B))
    if B >= 2:
        Bt = min(Bt, pl.cdiv(B, 2))
    G = pl.cdiv(B, Bt)
    Bp = G * Bt

    # --- wrapper-side weight prep (one-time XLA work) -----------------------
    ops_f = ops.astype(f32)
    otr_wa = params["o_trans_w"][:H]                                   # (H, 2H)
    ops_half_rep = jnp.repeat(ops_f @ params["o_trans_w"][H:], Bt, axis=0)
    ops_rep = jnp.repeat(ops_f, Bt, axis=0)                            # (O*Bt,2H)
    wfr_ww = jnp.concatenate([params["wf_w"][:H2],
                              params["wr_w"][:H2]], axis=1)            # (2H, 2O)
    wfr_op = jnp.concatenate([params["wf_w"][H2:],
                              params["wr_w"][H2:]], axis=1)            # (O*2H,2O)
    wu_w = params["wu_w"]                                              # (2O, O)

    # Pack every 1-D bias / LayerNorm vector (and the ft scalar) into one
    # buffer -> a single DMA, and ft stays runtime data (no recompile).
    P = max(H2, 2 * O, 8)

    def _row(v):
        v = jnp.asarray(v, f32).reshape(-1)
        return jnp.pad(v, (0, P - v.shape[0]))

    bias_pack = jnp.stack([
        _row(params["gc1_b"]), _row(params["gc2_b"]),
        _row(params["norm_a"]), _row(params["norm_b"]),
        _row(params["w_o_b"]), _row(params["n1_a"]), _row(params["n1_b"]),
        _row(params["o_trans_b"]), _row(params["n2_a"]), _row(params["n2_b"]),
        _row(jnp.concatenate([params["wf_b"], params["wr_b"]])),
        _row(params["wu_b"]),
        _row(jnp.asarray([ft], f32)),
    ])                                                                 # (13, P)
    assert bias_pack.shape[0] == _NUM_PACK_ROWS

    # --- batched inputs (w_all / word_op_t are NOT materialized) -----------
    attn_t = jnp.transpose(current_attn, (0, 2, 1))                    # (B,S,1)
    smask = seq_mask.astype(f32)[:, :, None]                           # (B,S,1)

    def pad_b(a):
        a = a.astype(f32)
        if Bp == a.shape[0]:
            return a
        return jnp.pad(a, ((0, Bp - a.shape[0]),) + ((0, 0),) * (a.ndim - 1))

    batched = [pad_b(encoder_outputs), pad_b(attn_t), pad_b(s),
               pad_b(word_word), pad_b(word_exist_mat), pad_b(word_op),
               pad_b(smask)]
    shared = [params["gc1_w"], params["gc2_w"], params["w_o_w"], otr_wa,
              ops_rep, ops_half_rep, wfr_ww, wfr_op, wu_w, bias_pack]
    shared = [jnp.asarray(a, f32) for a in shared]

    in_specs = []
    for a in batched:
        nd = a.ndim - 1
        in_specs.append(pl.BlockSpec((Bt,) + a.shape[1:],
                                     lambda b, nd=nd: (b,) + (0,) * nd))
    for a in shared:
        nd = a.ndim
        in_specs.append(pl.BlockSpec(a.shape, lambda b, nd=nd: (0,) * nd))

    out_specs = [
        # lane-dense op_o slab: last two dims are the full (Bt, O*2H) extent.
        pl.BlockSpec((1, Bt, O * H2), lambda b: (b, 0, 0)),
        pl.BlockSpec((Bt, S, O), lambda b: (b, 0, 0)),
    ]
    out_shape = (
        jax.ShapeDtypeStruct((G, Bt, O * H2), f32),
        jax.ShapeDtypeStruct((Bp, S, O), f32),
    )

    grid_spec = pltpu.PrefetchScalarGridSpec(
        num_scalar_prefetch=0,
        grid=(G,),
        in_specs=in_specs,
        out_specs=out_specs,
    )

    fn = pl.pallas_call(
        _make_kernel(matmul_dtype),
        grid_spec=grid_spec,
        out_shape=out_shape,
        compiler_params=pltpu.CompilerParams(
            # independent batch chunks -> both v7x TCs; no-op on v5e/v6e.
            dimension_semantics=("parallel",),
            # explicit scoped-VMEM budget (default is only 16/32 MiB);
            # 64 MiB is within physical VMEM on v5e/v6e/v7x.
            vmem_limit_bytes=64 * 1024 * 1024),
    )
    op_o_flat, wo = fn(*batched, *shared)
    op_o = op_o_flat.reshape(Bp, O, H2)[:B]
    return op_o, wo[:B]


# --------------------------- pure-JAX reference ------------------------------
def hgcn_reference(params, encoder_outputs, ops, s, current_attn,
                   word_word, word_op, word_exist_mat, seq_mask, ft=0.99):
    B, S, H = encoder_outputs.shape
    O = ops.shape[0]
    H2 = 2 * H

    def ln1(x, a, b, eps=1e-6):
        mean = jnp.mean(x, -1, keepdims=True)
        d = x - mean
        std = jnp.sqrt(jnp.sum(d * d, -1, keepdims=True))
        return a * d / (std + eps) + b

    s2w = jnp.transpose(current_attn, (0, 2, 1)) * s
    w_all = jnp.concatenate([s2w, encoder_outputs], -1)
    ww_adj = jnp.where(word_exist_mat != 1.0, 0.0, word_word)
    h1 = jax.nn.relu(jnp.einsum("bij,bjk->bik", ww_adj,
                                w_all @ params["gc1_w"]) + params["gc1_b"])
    gcn = jnp.einsum("bij,bjk->bik", ww_adj,
                     h1 @ params["gc2_w"]) + params["gc2_b"]
    w2w = ln1(gcn, params["norm_a"], params["norm_b"]) + w_all

    wo_adj = jnp.where(seq_mask[:, None, :] != 0.0, 0.0,
                       jnp.transpose(word_op, (0, 2, 1)))
    wo_adj = wo_adj / (jnp.sum(wo_adj, -1, keepdims=True) + 1e-30)
    op_trans = jax.nn.relu(
        jnp.einsum("bos,bsd->bod", wo_adj, w2w) @ params["w_o_w"]
        + params["w_o_b"])
    op_trans = ln1(op_trans, params["n1_a"], params["n1_b"])
    op_all = jnp.concatenate(
        [op_trans, jnp.broadcast_to(ops, (B, O, H2))], -1)
    op_h = jax.nn.relu(op_all @ params["o_trans_w"] + params["o_trans_b"])
    op_o = ln1(op_h, params["n2_a"], params["n2_b"]) + ops

    word_output = w2w / (jnp.sqrt(jnp.sum(w2w * w2w, -1, keepdims=True)) + 1e-30)
    op_n = op_o / (jnp.sqrt(jnp.sum(op_o * op_o, -1, keepdims=True)) + 1e-30)
    op_reshape = jnp.broadcast_to(op_n.reshape(B, 1, -1), (B, S, O * H2))
    concate = jnp.concatenate([word_output, op_reshape], -1)
    forget = jnp.maximum(jax.nn.sigmoid(concate @ params["wf_w"] + params["wf_b"]), ft)
    rel = concate @ params["wr_w"] + params["wr_b"]
    upd = jax.nn.softmax(
        jax.nn.relu(jnp.concatenate([word_op, rel], -1) @ params["wu_w"]
                    + params["wu_b"]), axis=-1)
    wo_new = forget * word_op + (1.0 - forget) * upd
    return op_o, wo_new


# ------------------------------- main ----------------------------------------
if __name__ == "__main__":
    B, S, H, O = 2, 8, 32, 4          # batch, seq, hidden_size, op_nums
    H2, H3 = 2 * H, 3 * H
    FT = 0.99

    key = jax.random.PRNGKey(0)
    ks = list(jax.random.split(key, 32))

    def uni(k, shape, scale):
        return jax.random.uniform(k, shape, jnp.float32, -scale, scale)

    # deterministic parameter init (shapes follow HGCN.__init__)
    params = {
        "gc1_w": uni(ks[0], (H2, H), 1.0 / jnp.sqrt(H)),
        "gc1_b": uni(ks[1], (H,), 1.0 / jnp.sqrt(H)),
        "gc2_w": uni(ks[2], (H, H2), 1.0 / jnp.sqrt(H2)),
        "gc2_b": uni(ks[3], (H2,), 1.0 / jnp.sqrt(H2)),
        "norm_a": jnp.ones((H2,), jnp.float32),
        "norm_b": jnp.zeros((H2,), jnp.float32),
        "n1_a": jnp.ones((H,), jnp.float32),
        "n1_b": jnp.zeros((H,), jnp.float32),
        "n2_a": jnp.ones((H2,), jnp.float32),
        "n2_b": jnp.zeros((H2,), jnp.float32),
        "w_o_w": uni(ks[4], (H2, H), 1.0 / jnp.sqrt(H2)),
        "w_o_b": uni(ks[5], (H,), 1.0 / jnp.sqrt(H2)),
        "o_trans_w": uni(ks[6], (H3, H2), 1.0 / jnp.sqrt(H3)),
        "o_trans_b": uni(ks[7], (H2,), 1.0 / jnp.sqrt(H3)),
        "wf_w": uni(ks[8], (H2 + O * H2, O), 1.0 / jnp.sqrt(H2 + O * H2)),
        "wf_b": uni(ks[9], (O,), 1.0 / jnp.sqrt(H2 + O * H2)),
        "wr_w": uni(ks[10], (H2 + O * H2, O), 1.0 / jnp.sqrt(H2 + O * H2)),
        "wr_b": uni(ks[11], (O,), 1.0 / jnp.sqrt(H2 + O * H2)),
        "wu_w": uni(ks[12], (2 * O, O), 1.0 / jnp.sqrt(2 * O)),
        "wu_b": uni(ks[13], (O,), 1.0 / jnp.sqrt(2 * O)),
    }

    # deterministic example inputs
    encoder_outputs = jax.random.normal(ks[14], (B, S, H), jnp.float32)
    ops = jax.random.normal(ks[15], (O, H2), jnp.float32)
    s_vec = jax.random.normal(ks[16], (B, 1, H), jnp.float32)
    current_attn = jax.nn.softmax(
        jax.random.normal(ks[17], (B, 1, S), jnp.float32), axis=-1)
    word_word = jax.random.uniform(ks[18], (B, S, S), jnp.float32)
    word_op = jax.nn.softmax(
        jax.random.normal(ks[19], (B, S, O), jnp.float32), axis=-1)
    word_exist_mat = (jax.random.uniform(ks[20], (B, S, S)) > 0.3).astype(jnp.float32)
    seq_mask = jnp.stack([
        jnp.zeros((S,), jnp.float32),
        jnp.concatenate([jnp.zeros((S - 2,)), jnp.ones((2,))]).astype(jnp.float32),
    ], axis=0)                                                        # (B, S)

    op_o, wo = hgcn_pallas(params, encoder_outputs, ops, s_vec, current_attn,
                           word_word, word_op, word_exist_mat, seq_mask, ft=FT)
    op_o = jax.block_until_ready(op_o)
    wo = jax.block_until_ready(wo)

    op_o_ref, wo_ref = hgcn_reference(params, encoder_outputs, ops, s_vec,
                                      current_attn, word_word, word_op,
                                      word_exist_mat, seq_mask, ft=FT)
    assert jnp.allclose(op_o, op_o_ref, rtol=1e-3, atol=1e-3), "op_o mismatch"
    assert jnp.allclose(wo, wo_ref, rtol=1e-3, atol=1e-3), "wo mismatch"

    print("KERNEL_OK")
</pallas_src>

<mosaic_0001>
module attributes {stable_mosaic.version = 11 : i64} {
  func.func @kernel(%arg0: i32, %arg1: memref<1x8x32xf32, #tpu.memory_space<vmem>>, %arg2: memref<1x8x1xf32, #tpu.memory_space<vmem>>, %arg3: memref<1x1x32xf32, #tpu.memory_space<vmem>>, %arg4: memref<1x8x8xf32, #tpu.memory_space<vmem>>, %arg5: memref<1x8x8xf32, #tpu.memory_space<vmem>>, %arg6: memref<1x8x4xf32, #tpu.memory_space<vmem>>, %arg7: memref<1x8x1xf32, #tpu.memory_space<vmem>>, %arg8: memref<64x32xf32, #tpu.memory_space<vmem>>, %arg9: memref<32x64xf32, #tpu.memory_space<vmem>>, %arg10: memref<64x32xf32, #tpu.memory_space<vmem>>, %arg11: memref<32x64xf32, #tpu.memory_space<vmem>>, %arg12: memref<4x64xf32, #tpu.memory_space<vmem>>, %arg13: memref<4x64xf32, #tpu.memory_space<vmem>>, %arg14: memref<64x8xf32, #tpu.memory_space<vmem>>, %arg15: memref<256x8xf32, #tpu.memory_space<vmem>>, %arg16: memref<8x4xf32, #tpu.memory_space<vmem>>, %arg17: memref<13x64xf32, #tpu.memory_space<vmem>>, %arg18: memref<1x1x256xf32, #tpu.memory_space<vmem>>, %arg19: memref<1x8x4xf32, #tpu.memory_space<vmem>>) attributes {dimension_semantics = [#tpu.dimension_semantics<parallel>], iteration_bounds = array<i64: 2>, scalar_prefetch = 0 : i64, scratch_operands = 0 : i64, tpu.core_type = #tpu.core_type<tc>, window_params = [{transform_indices = @transform_0, window_bounds = array<i64: 1, 8, 32>}, {transform_indices = @transform_1, window_bounds = array<i64: 1, 8, 1>}, {transform_indices = @transform_2, window_bounds = array<i64: 1, 1, 32>}, {transform_indices = @transform_3, window_bounds = array<i64: 1, 8, 8>}, {transform_indices = @transform_4, window_bounds = array<i64: 1, 8, 8>}, {transform_indices = @transform_5, window_bounds = array<i64: 1, 8, 4>}, {transform_indices = @transform_6, window_bounds = array<i64: 1, 8, 1>}, {pipeline_mode = #tpu.pipeline_mode<synchronous>, transform_indices = @transform_7, window_bounds = array<i64: 64, 32>}, {pipeline_mode = #tpu.pipeline_mode<synchronous>, transform_indices = @transform_8, window_bounds = array<i64: 32, 64>}, {pipeline_mode = #tpu.pipeline_mode<synchronous>, transform_indices = @transform_9, window_bounds = array<i64: 64, 32>}, {pipeline_mode = #tpu.pipeline_mode<synchronous>, transform_indices = @transform_10, window_bounds = array<i64: 32, 64>}, {pipeline_mode = #tpu.pipeline_mode<synchronous>, transform_indices = @transform_11, window_bounds = array<i64: 4, 64>}, {pipeline_mode = #tpu.pipeline_mode<synchronous>, transform_indices = @transform_12, window_bounds = array<i64: 4, 64>}, {pipeline_mode = #tpu.pipeline_mode<synchronous>, transform_indices = @transform_13, window_bounds = array<i64: 64, 8>}, {pipeline_mode = #tpu.pipeline_mode<synchronous>, transform_indices = @transform_14, window_bounds = array<i64: 256, 8>}, {pipeline_mode = #tpu.pipeline_mode<synchronous>, transform_indices = @transform_15, window_bounds = array<i64: 8, 4>}, {pipeline_mode = #tpu.pipeline_mode<synchronous>, transform_indices = @transform_16, window_bounds = array<i64: 13, 64>}, {transform_indices = @transform_17, window_bounds = array<i64: 1, 1, 256>}, {transform_indices = @transform_18, window_bounds = array<i64: 1, 8, 4>}]} {
    %c0 = arith.constant 0 : index
    %c0_0 = arith.constant 0 : index
    %c0_1 = arith.constant 0 : index
    %0 = vector.load %arg1[%c0, %c0_0, %c0_1] : memref<1x8x32xf32, #tpu.memory_space<vmem>>, vector<1x8x32xf32>
    %c0_2 = arith.constant 0 : index
    %c0_3 = arith.constant 0 : index
    %c0_4 = arith.constant 0 : index
    %1 = vector.load %arg6[%c0_2, %c0_3, %c0_4] : memref<1x8x4xf32, #tpu.memory_space<vmem>>, vector<1x8x4xf32>
    %c0_5 = arith.constant 0 : index
    %c0_6 = arith.constant 0 : index
    %c0_7 = arith.constant 0 : index
    %2 = vector.load %arg2[%c0_5, %c0_6, %c0_7] : memref<1x8x1xf32, #tpu.memory_space<vmem>>, vector<1x8x1xf32>
    %c0_8 = arith.constant 0 : index
    %c0_9 = arith.constant 0 : index
    %c0_10 = arith.constant 0 : index
    %3 = vector.load %arg3[%c0_8, %c0_9, %c0_10] : memref<1x1x32xf32, #tpu.memory_space<vmem>>, vector<1x1x32xf32>
    %4 = vector.broadcast %2 : vector<1x8x1xf32> to vector<1x8x32xf32>
    %5 = vector.broadcast %3 : vector<1x1x32xf32> to vector<1x8x32xf32>
    %6 = arith.mulf %4, %5 : vector<1x8x32xf32>
    %7 = tpu.concatenate %6, %0 in 2 : vector<1x8x32xf32>, vector<1x8x32xf32> -> vector<1x8x64xf32>
    %c0_11 = arith.constant 0 : index
    %c0_12 = arith.constant 0 : index
    %c0_13 = arith.constant 0 : index
    %8 = vector.load %arg5[%c0_11, %c0_12, %c0_13] : memref<1x8x8xf32, #tpu.memory_space<vmem>>, vector<1x8x8xf32>
    %cst = arith.constant 1.000000e+00 : f32
    %9 = vector.broadcast %cst : f32 to vector<1x8x8xf32>
    %10 = arith.cmpf oeq, %8, %9 : vector<1x8x8xf32>
    %c0_14 = arith.constant 0 : index
    %c0_15 = arith.constant 0 : index
    %c0_16 = arith.constant 0 : index
    %11 = vector.load %arg4[%c0_14, %c0_15, %c0_16] : memref<1x8x8xf32, #tpu.memory_space<vmem>>, vector<1x8x8xf32>
    %cst_17 = arith.constant 0.000000e+00 : f32
    %12 = vector.broadcast %cst_17 : f32 to vector<1x8x8xf32>
    %13 = arith.select %10, %11, %12 : vector<1x8x8xi1>, vector<1x8x8xf32>
    %14 = vector.shape_cast %7 : vector<1x8x64xf32> to vector<8x64xf32>
    %c0_18 = arith.constant 0 : index
    %c0_19 = arith.constant 0 : index
    %15 = vector.load %arg8[%c0_18, %c0_19] : memref<64x32xf32, #tpu.memory_space<vmem>>, vector<64x32xf32>
    %cst_20 = arith.constant dense<0.000000e+00> : vector<8x32xf32>
    %16 = tpu.matmul %14, %15, %cst_20 {dimension_numbers = #tpu.dot_dimension_numbers<[1], [0], [0], [1], [0, 0, 1, 1], [], []>} : vector<8x64xf32>, vector<64x32xf32>, vector<8x32xf32> -> vector<8x32xf32>
    %17 = vector.shape_cast %16 : vector<8x32xf32> to vector<1x8x32xf32>
    "tpu.trace_start"() <{level = 10 : i32, message = "bij,bjk->bik"}> : () -> ()
    %cst_21 = arith.constant dense<0.000000e+00> : vector<1x8x32xf32>
    %18 = tpu.matmul %13, %17, %cst_21 {dimension_numbers = #tpu.dot_dimension_numbers<[2], [1], [1], [2], [0, 0, 0, 1, 1, 2], [0], [0]>} : vector<1x8x8xf32>, vector<1x8x32xf32>, vector<1x8x32xf32> -> vector<1x8x32xf32>
    "tpu.trace_stop"() : () -> ()
    %c0_22 = arith.constant 0 : index
    %c0_23 = arith.constant 0 : index
    %19 = vector.load %arg17[%c0_22, %c0_23] : memref<13x64xf32, #tpu.memory_space<vmem>>, vector<1x32xf32>
    %20 = vector.shape_cast %19 : vector<1x32xf32> to vector<1x1x32xf32>
    %21 = vector.broadcast %20 : vector<1x1x32xf32> to vector<1x8x32xf32>
    %22 = arith.addf %18, %21 : vector<1x8x32xf32>
    %cst_24 = arith.constant 0.000000e+00 : f32
    %23 = vector.broadcast %cst_24 : f32 to vector<1x8x32xf32>
    %24 = arith.maximumf %22, %23 : vector<1x8x32xf32>
    %25 = vector.shape_cast %24 : vector<1x8x32xf32> to vector<8x32xf32>
    %c0_25 = arith.constant 0 : index
    %c0_26 = arith.constant 0 : index
    %26 = vector.load %arg9[%c0_25, %c0_26] : memref<32x64xf32, #tpu.memory_space<vmem>>, vector<32x64xf32>
    %cst_27 = arith.constant dense<0.000000e+00> : vector<8x64xf32>
    %27 = tpu.matmul %25, %26, %cst_27 {dimension_numbers = #tpu.dot_dimension_numbers<[1], [0], [0], [1], [0, 0, 1, 1], [], []>} : vector<8x32xf32>, vector<32x64xf32>, vector<8x64xf32> -> vector<8x64xf32>
    %28 = vector.shape_cast %27 : vector<8x64xf32> to vector<1x8x64xf32>
    "tpu.trace_start"() <{level = 10 : i32, message = "bij,bjk->bik"}> : () -> ()
    %cst_28 = arith.constant dense<0.000000e+00> : vector<1x8x64xf32>
    %29 = tpu.matmul %13, %28, %cst_28 {dimension_numbers = #tpu.dot_dimension_numbers<[2], [1], [1], [2], [0, 0, 0, 1, 1, 2], [0], [0]>} : vector<1x8x8xf32>, vector<1x8x64xf32>, vector<1x8x64xf32> -> vector<1x8x64xf32>
    "tpu.trace_stop"() : () -> ()
    %c1 = arith.constant 1 : index
    %c0_29 = arith.constant 0 : index
    %30 = vector.load %arg17[%c1, %c0_29] : memref<13x64xf32, #tpu.memory_space<vmem>>, vector<1x64xf32>
    %31 = vector.shape_cast %30 : vector<1x64xf32> to vector<1x1x64xf32>
    %32 = vector.broadcast %31 : vector<1x1x64xf32> to vector<1x8x64xf32>
    %33 = arith.addf %29, %32 : vector<1x8x64xf32>
    %c2 = arith.constant 2 : index
    %c0_30 = arith.constant 0 : index
    %34 = vector.load %arg17[%c2, %c0_30] : memref<13x64xf32, #tpu.memory_space<vmem>>, vector<1x64xf32>
    %c3 = arith.constant 3 : index
    %c0_31 = arith.constant 0 : index
    %35 = vector.load %arg17[%c3, %c0_31] : memref<13x64xf32, #tpu.memory_space<vmem>>, vector<1x64xf32>
    %cst_32 = arith.constant dense<0.000000e+00> : vector<1x8xf32>
    %36 = vector.multi_reduction <add>, %33, %cst_32 [2] : vector<1x8x64xf32> to vector<1x8xf32>
    %37 = vector.shape_cast %36 : vector<1x8xf32> to vector<1x8x1xf32>
    %cst_33 = arith.constant 6.400000e+01 : f32
    %38 = vector.broadcast %cst_33 : f32 to vector<1x8x1xf32>
    %39 = arith.divf %37, %38 : vector<1x8x1xf32>
    %40 = vector.broadcast %39 : vector<1x8x1xf32> to vector<1x8x64xf32>
    %41 = arith.subf %33, %40 : vector<1x8x64xf32>
    %42 = arith.mulf %41, %41 : vector<1x8x64xf32>
    %cst_34 = arith.constant dense<0.000000e+00> : vector<1x8xf32>
    %43 = vector.multi_reduction <add>, %42, %cst_34 [2] : vector<1x8x64xf32> to vector<1x8xf32>
    %44 = vector.shape_cast %43 : vector<1x8xf32> to vector<1x8x1xf32>
    %45 = math.sqrt %44 : vector<1x8x1xf32>
    %46 = vector.shape_cast %34 : vector<1x64xf32> to vector<1x1x64xf32>
    %47 = vector.broadcast %46 : vector<1x1x64xf32> to vector<1x8x64xf32>
    %48 = arith.mulf %47, %41 : vector<1x8x64xf32>
    %cst_35 = arith.constant 9.99999997E-7 : f32
    %49 = vector.broadcast %cst_35 : f32 to vector<1x8x1xf32>
    %50 = arith.addf %45, %49 : vector<1x8x1xf32>
    %51 = vector.broadcast %50 : vector<1x8x1xf32> to vector<1x8x64xf32>
    %52 = arith.divf %48, %51 : vector<1x8x64xf32>
    %53 = vector.shape_cast %35 : vector<1x64xf32> to vector<1x1x64xf32>
    %54 = vector.broadcast %53 : vector<1x1x64xf32> to vector<1x8x64xf32>
    %55 = arith.addf %52, %54 : vector<1x8x64xf32>
    %56 = arith.addf %55, %7 : vector<1x8x64xf32>
    %c0_36 = arith.constant 0 : index
    %c0_37 = arith.constant 0 : index
    %c0_38 = arith.constant 0 : index
    %57 = vector.load %arg7[%c0_36, %c0_37, %c0_38] : memref<1x8x1xf32, #tpu.memory_space<vmem>>, vector<1x8x1xf32>
    %cst_39 = arith.constant 0.000000e+00 : f32
    %58 = vector.broadcast %cst_39 : f32 to vector<1x8x1xf32>
    %59 = arith.cmpf one, %57, %58 : vector<1x8x1xf32>
    %cst_40 = arith.constant 0.000000e+00 : f32
    %60 = vector.shape_cast %59 : vector<1x8x1xi1> to vector<1x8x1xi1>
    %61 = vector.broadcast %60 : vector<1x8x1xi1> to vector<1x8x4xi1>
    %62 = vector.broadcast %cst_40 : f32 to vector<1x8x4xf32>
    %63 = arith.select %61, %62, %1 : vector<1x8x4xi1>, vector<1x8x4xf32>
    %cst_41 = arith.constant dense<0.000000e+00> : vector<1x4xf32>
    %64 = vector.multi_reduction <add>, %63, %cst_41 [1] : vector<1x8x4xf32> to vector<1x4xf32>
    %65 = vector.shape_cast %64 : vector<1x4xf32> to vector<1x1x4xf32>
    %cst_42 = arith.constant 1.000000e-30 : f32
    %66 = vector.broadcast %cst_42 : f32 to vector<1x1x4xf32>
    %67 = arith.addf %65, %66 : vector<1x1x4xf32>
    %68 = tpu.reciprocal %67 : vector<1x1x4xf32> -> vector<1x1x4xf32>
    %69 = vector.broadcast %68 : vector<1x1x4xf32> to vector<1x8x4xf32>
    %70 = arith.mulf %63, %69 : vector<1x8x4xf32>
    %71 = vector.extract_strided_slice %70 {offsets = [0, 0, 0], sizes = [1, 8, 1], strides = [1, 1, 1]} : vector<1x8x4xf32> to vector<1x8x1xf32>
    %72 = vector.broadcast %71 : vector<1x8x1xf32> to vector<1x8x64xf32>
    %73 = arith.mulf %72, %56 : vector<1x8x64xf32>
    %cst_43 = arith.constant dense<0.000000e+00> : vector<1x64xf32>
    %74 = vector.multi_reduction <add>, %73, %cst_43 [1] : vector<1x8x64xf32> to vector<1x64xf32>
    %75 = vector.extract_strided_slice %70 {offsets = [0, 0, 1], sizes = [1, 8, 1], strides = [1, 1, 1]} : vector<1x8x4xf32> to vector<1x8x1xf32>
    %76 = vector.broadcast %75 : vector<1x8x1xf32> to vector<1x8x64xf32>
    %77 = arith.mulf %76, %56 : vector<1x8x64xf32>
    %cst_44 = arith.constant dense<0.000000e+00> : vector<1x64xf32>
    %78 = vector.multi_reduction <add>, %77, %cst_44 [1] : vector<1x8x64xf32> to vector<1x64xf32>
    %79 = vector.extract_strided_slice %70 {offsets = [0, 0, 2], sizes = [1, 8, 1], strides = [1, 1, 1]} : vector<1x8x4xf32> to vector<1x8x1xf32>
    %80 = vector.broadcast %79 : vector<1x8x1xf32> to vector<1x8x64xf32>
    %81 = arith.mulf %80, %56 : vector<1x8x64xf32>
    %cst_45 = arith.constant dense<0.000000e+00> : vector<1x64xf32>
    %82 = vector.multi_reduction <add>, %81, %cst_45 [1] : vector<1x8x64xf32> to vector<1x64xf32>
    %83 = vector.extract_strided_slice %70 {offsets = [0, 0, 3], sizes = [1, 8, 1], strides = [1, 1, 1]} : vector<1x8x4xf32> to vector<1x8x1xf32>
    %84 = vector.broadcast %83 : vector<1x8x1xf32> to vector<1x8x64xf32>
    %85 = arith.mulf %84, %56 : vector<1x8x64xf32>
    %cst_46 = arith.constant dense<0.000000e+00> : vector<1x64xf32>
    %86 = vector.multi_reduction <add>, %85, %cst_46 [1] : vector<1x8x64xf32> to vector<1x64xf32>
    %87 = tpu.concatenate %74, %78, %82, %86 in 0 : vector<1x64xf32>, vector<1x64xf32>, vector<1x64xf32>, vector<1x64xf32> -> vector<4x64xf32>
    %c0_47 = arith.constant 0 : index
    %c0_48 = arith.constant 0 : index
    %88 = vector.load %arg10[%c0_47, %c0_48] : memref<64x32xf32, #tpu.memory_space<vmem>>, vector<64x32xf32>
    %cst_49 = arith.constant dense<0.000000e+00> : vector<4x32xf32>
    %89 = tpu.matmul %87, %88, %cst_49 {dimension_numbers = #tpu.dot_dimension_numbers<[1], [0], [0], [1], [0, 0, 1, 1], [], []>} : vector<4x64xf32>, vector<64x32xf32>, vector<4x32xf32> -> vector<4x32xf32>
    %c4 = arith.constant 4 : index
    %c0_50 = arith.constant 0 : index
    %90 = vector.load %arg17[%c4, %c0_50] : memref<13x64xf32, #tpu.memory_space<vmem>>, vector<1x32xf32>
    %91 = vector.broadcast %90 : vector<1x32xf32> to vector<4x32xf32>
    %92 = arith.addf %89, %91 : vector<4x32xf32>
    %cst_51 = arith.constant 0.000000e+00 : f32
    %93 = vector.broadcast %cst_51 : f32 to vector<4x32xf32>
    %94 = arith.maximumf %92, %93 : vector<4x32xf32>
    %c5 = arith.constant 5 : index
    %c0_52 = arith.constant 0 : index
    %95 = vector.load %arg17[%c5, %c0_52] : memref<13x64xf32, #tpu.memory_space<vmem>>, vector<1x32xf32>
    %c6 = arith.constant 6 : index
    %c0_53 = arith.constant 0 : index
    %96 = vector.load %arg17[%c6, %c0_53] : memref<13x64xf32, #tpu.memory_space<vmem>>, vector<1x32xf32>
    %cst_54 = arith.constant dense<0.000000e+00> : vector<4xf32>
    %97 = vector.multi_reduction <add>, %94, %cst_54 [1] : vector<4x32xf32> to vector<4xf32>
    %98 = vector.shape_cast %97 : vector<4xf32> to vector<4x1xf32>
    %cst_55 = arith.constant 3.200000e+01 : f32
    %99 = vector.broadcast %cst_55 : f32 to vector<4x1xf32>
    %100 = arith.divf %98, %99 : vector<4x1xf32>
    %101 = vector.broadcast %100 : vector<4x1xf32> to vector<4x32xf32>
    %102 = arith.subf %94, %101 : vector<4x32xf32>
    %103 = arith.mulf %102, %102 : vector<4x32xf32>
    %cst_56 = arith.constant dense<0.000000e+00> : vector<4xf32>
    %104 = vector.multi_reduction <add>, %103, %cst_56 [1] : vector<4x32xf32> to vector<4xf32>
    %105 = vector.shape_cast %104 : vector<4xf32> to vector<4x1xf32>
    %106 = math.sqrt %105 : vector<4x1xf32>
    %107 = vector.broadcast %95 : vector<1x32xf32> to vector<4x32xf32>
    %108 = arith.mulf %107, %102 : vector<4x32xf32>
    %cst_57 = arith.constant 9.99999997E-7 : f32
    %109 = vector.broadcast %cst_57 : f32 to vector<4x1xf32>
    %110 = arith.addf %106, %109 : vector<4x1xf32>
    %111 = vector.broadcast %110 : vector<4x1xf32> to vector<4x32xf32>
    %112 = arith.divf %108, %111 : vector<4x32xf32>
    %113 = vector.broadcast %96 : vector<1x32xf32> to vector<4x32xf32>
    %114 = arith.addf %112, %113 : vector<4x32xf32>
    %c0_58 = arith.constant 0 : index
    %c0_59 = arith.constant 0 : index
    %115 = vector.load %arg11[%c0_58, %c0_59] : memref<32x64xf32, #tpu.memory_space<vmem>>, vector<32x64xf32>
    %cst_60 = arith.constant dense<0.000000e+00> : vector<4x64xf32>
    %116 = tpu.matmul %114, %115, %cst_60 {dimension_numbers = #tpu.dot_dimension_numbers<[1], [0], [0], [1], [0, 0, 1, 1], [], []>} : vector<4x32xf32>, vector<32x64xf32>, vector<4x64xf32> -> vector<4x64xf32>
    %c0_61 = arith.constant 0 : index
    %c0_62 = arith.constant 0 : index
    %117 = vector.load %arg13[%c0_61, %c0_62] : memref<4x64xf32, #tpu.memory_space<vmem>>, vector<4x64xf32>
    %118 = arith.addf %116, %117 : vector<4x64xf32>
    %c7 = arith.constant 7 : index
    %c0_63 = arith.constant 0 : index
    %119 = vector.load %arg17[%c7, %c0_63] : memref<13x64xf32, #tpu.memory_space<vmem>>, vector<1x64xf32>
    %120 = vector.broadcast %119 : vector<1x64xf32> to vector<4x64xf32>
    %121 = arith.addf %118, %120 : vector<4x64xf32>
    %cst_64 = arith.constant 0.000000e+00 : f32
    %122 = vector.broadcast %cst_64 : f32 to vector<4x64xf32>
    %123 = arith.maximumf %121, %122 : vector<4x64xf32>
    %c8 = arith.constant 8 : index
    %c0_65 = arith.constant 0 : index
    %124 = vector.load %arg17[%c8, %c0_65] : memref<13x64xf32, #tpu.memory_space<vmem>>, vector<1x64xf32>
    %c9 = arith.constant 9 : index
    %c0_66 = arith.constant 0 : index
    %125 = vector.load %arg17[%c9, %c0_66] : memref<13x64xf32, #tpu.memory_space<vmem>>, vector<1x64xf32>
    %cst_67 = arith.constant dense<0.000000e+00> : vector<4xf32>
    %126 = vector.multi_reduction <add>, %123, %cst_67 [1] : vector<4x64xf32> to vector<4xf32>
    %127 = vector.shape_cast %126 : vector<4xf32> to vector<4x1xf32>
    %cst_68 = arith.constant 6.400000e+01 : f32
    %128 = vector.broadcast %cst_68 : f32 to vector<4x1xf32>
    %129 = arith.divf %127, %128 : vector<4x1xf32>
    %130 = vector.broadcast %129 : vector<4x1xf32> to vector<4x64xf32>
    %131 = arith.subf %123, %130 : vector<4x64xf32>
    %132 = arith.mulf %131, %131 : vector<4x64xf32>
    %cst_69 = arith.constant dense<0.000000e+00> : vector<4xf32>
    %133 = vector.multi_reduction <add>, %132, %cst_69 [1] : vector<4x64xf32> to vector<4xf32>
    %134 = vector.shape_cast %133 : vector<4xf32> to vector<4x1xf32>
    %135 = math.sqrt %134 : vector<4x1xf32>
    %136 = vector.broadcast %124 : vector<1x64xf32> to vector<4x64xf32>
    %137 = arith.mulf %136, %131 : vector<4x64xf32>
    %cst_70 = arith.constant 9.99999997E-7 : f32
    %138 = vector.broadcast %cst_70 : f32 to vector<4x1xf32>
    %139 = arith.addf %135, %138 : vector<4x1xf32>
    %140 = vector.broadcast %139 : vector<4x1xf32> to vector<4x64xf32>
    %141 = arith.divf %137, %140 : vector<4x64xf32>
    %142 = vector.broadcast %125 : vector<1x64xf32> to vector<4x64xf32>
    %143 = arith.addf %141, %142 : vector<4x64xf32>
    %c0_71 = arith.constant 0 : index
    %c0_72 = arith.constant 0 : index
    %144 = vector.load %arg12[%c0_71, %c0_72] : memref<4x64xf32, #tpu.memory_space<vmem>>, vector<4x64xf32>
    %145 = arith.addf %143, %144 : vector<4x64xf32>
    %146 = arith.mulf %56, %56 : vector<1x8x64xf32>
    %cst_73 = arith.constant dense<0.000000e+00> : vector<1x8xf32>
    %147 = vector.multi_reduction <add>, %146, %cst_73 [2] : vector<1x8x64xf32> to vector<1x8xf32>
    %148 = vector.shape_cast %147 : vector<1x8xf32> to vector<1x8x1xf32>
    %cst_74 = arith.constant 9.99999996E-13 : f32
    %149 = vector.broadcast %cst_74 : f32 to vector<1x8x1xf32>
    %150 = arith.addf %148, %149 : vector<1x8x1xf32>
    %151 = math.rsqrt %150 : vector<1x8x1xf32>
    %152 = vector.broadcast %151 : vector<1x8x1xf32> to vector<1x8x64xf32>
    %153 = arith.mulf %56, %152 : vector<1x8x64xf32>
    %154 = arith.mulf %145, %145 : vector<4x64xf32>
    %cst_75 = arith.constant dense<0.000000e+00> : vector<4xf32>
    %155 = vector.multi_reduction <add>, %154, %cst_75 [1] : vector<4x64xf32> to vector<4xf32>
    %156 = vector.shape_cast %155 : vector<4xf32> to vector<4x1xf32>
    %cst_76 = arith.constant 9.99999996E-13 : f32
    %157 = vector.broadcast %cst_76 : f32 to vector<4x1xf32>
    %158 = arith.addf %156, %157 : vector<4x1xf32>
    %159 = math.rsqrt %158 : vector<4x1xf32>
    %160 = vector.broadcast %159 : vector<4x1xf32> to vector<4x64xf32>
    %161 = arith.mulf %145, %160 : vector<4x64xf32>
    %162 = vector.extract_strided_slice %161 {offsets = [0, 0], sizes = [1, 64], strides = [1, 1]} : vector<4x64xf32> to vector<1x64xf32>
    %163 = vector.extract_strided_slice %161 {offsets = [1, 0], sizes = [1, 64], strides = [1, 1]} : vector<4x64xf32> to vector<1x64xf32>
    %164 = vector.extract_strided_slice %161 {offsets = [2, 0], sizes = [1, 64], strides = [1, 1]} : vector<4x64xf32> to vector<1x64xf32>
    %165 = vector.extract_strided_slice %161 {offsets = [3, 0], sizes = [1, 64], strides = [1, 1]} : vector<4x64xf32> to vector<1x64xf32>
    %166 = tpu.concatenate %162, %163, %164, %165 in 1 : vector<1x64xf32>, vector<1x64xf32>, vector<1x64xf32>, vector<1x64xf32> -> vector<1x256xf32>
    %167 = vector.extract_strided_slice %145 {offsets = [0, 0], sizes = [1, 64], strides = [1, 1]} : vector<4x64xf32> to vector<1x64xf32>
    %168 = vector.extract_strided_slice %145 {offsets = [1, 0], sizes = [1, 64], strides = [1, 1]} : vector<4x64xf32> to vector<1x64xf32>
    %169 = vector.extract_strided_slice %145 {offsets = [2, 0], sizes = [1, 64], strides = [1, 1]} : vector<4x64xf32> to vector<1x64xf32>
    %170 = vector.extract_strided_slice %145 {offsets = [3, 0], sizes = [1, 64], strides = [1, 1]} : vector<4x64xf32> to vector<1x64xf32>
    %171 = tpu.concatenate %167, %168, %169, %170 in 1 : vector<1x64xf32>, vector<1x64xf32>, vector<1x64xf32>, vector<1x64xf32> -> vector<1x256xf32>
    %172 = vector.shape_cast %153 : vector<1x8x64xf32> to vector<8x64xf32>
    %c0_77 = arith.constant 0 : index
    %c0_78 = arith.constant 0 : index
    %173 = vector.load %arg14[%c0_77, %c0_78] : memref<64x8xf32, #tpu.memory_space<vmem>>, vector<64x8xf32>
    %cst_79 = arith.constant dense<0.000000e+00> : vector<8x8xf32>
    %174 = tpu.matmul %172, %173, %cst_79 {dimension_numbers = #tpu.dot_dimension_numbers<[1], [0], [0], [1], [0, 0, 1, 1], [], []>} : vector<8x64xf32>, vector<64x8xf32>, vector<8x8xf32> -> vector<8x8xf32>
    %175 = vector.shape_cast %174 : vector<8x8xf32> to vector<1x8x8xf32>
    %c0_80 = arith.constant 0 : index
    %c0_81 = arith.constant 0 : index
    %176 = vector.load %arg15[%c0_80, %c0_81] : memref<256x8xf32, #tpu.memory_space<vmem>>, vector<256x8xf32>
    %cst_82 = arith.constant dense<0.000000e+00> : vector<1x8xf32>
    %177 = tpu.matmul %166, %176, %cst_82 {dimension_numbers = #tpu.dot_dimension_numbers<[1], [0], [0], [1], [0, 0, 1, 1], [], []>} : vector<1x256xf32>, vector<256x8xf32>, vector<1x8xf32> -> vector<1x8xf32>
    %178 = vector.shape_cast %177 : vector<1x8xf32> to vector<1x1x8xf32>
    %179 = vector.broadcast %178 : vector<1x1x8xf32> to vector<1x8x8xf32>
    %180 = arith.addf %175, %179 : vector<1x8x8xf32>
    %c10 = arith.constant 10 : index
    %c0_83 = arith.constant 0 : index
    %181 = vector.load %arg17[%c10, %c0_83] : memref<13x64xf32, #tpu.memory_space<vmem>>, vector<1x8xf32>
    %182 = vector.shape_cast %181 : vector<1x8xf32> to vector<1x1x8xf32>
    %183 = vector.broadcast %182 : vector<1x1x8xf32> to vector<1x8x8xf32>
    %184 = arith.addf %180, %183 : vector<1x8x8xf32>
    %c12 = arith.constant 12 : index
    %c0_84 = arith.constant 0 : index
    %185 = vector.load %arg17[%c12, %c0_84] : memref<13x64xf32, #tpu.memory_space<vmem>>, vector<1x1xf32>
    %186 = vector.extract_strided_slice %184 {offsets = [0, 0, 0], sizes = [1, 8, 4], strides = [1, 1, 1]} : vector<1x8x8xf32> to vector<1x8x4xf32>
    %187 = arith.negf %186 : vector<1x8x4xf32>
    %188 = math.exp %187 : vector<1x8x4xf32>
    %cst_85 = arith.constant 1.000000e+00 : f32
    %189 = vector.broadcast %cst_85 : f32 to vector<1x8x4xf32>
    %190 = arith.addf %189, %188 : vector<1x8x4xf32>
    %191 = arith.divf %189, %190 : vector<1x8x4xf32>
    %192 = vector.shape_cast %185 : vector<1x1xf32> to vector<1x1x1xf32>
    %193 = vector.broadcast %192 : vector<1x1x1xf32> to vector<1x8x4xf32>
    %194 = arith.maximumf %191, %193 : vector<1x8x4xf32>
    %195 = vector.extract_strided_slice %184 {offsets = [0, 0, 4], sizes = [1, 8, 4], strides = [1, 1, 1]} : vector<1x8x8xf32> to vector<1x8x4xf32>
    %196 = tpu.concatenate %1, %195 in 2 : vector<1x8x4xf32>, vector<1x8x4xf32> -> vector<1x8x8xf32>
    %197 = vector.shape_cast %196 : vector<1x8x8xf32> to vector<8x8xf32>
    %c0_86 = arith.constant 0 : index
    %c0_87 = arith.constant 0 : index
    %198 = vector.load %arg16[%c0_86, %c0_87] : memref<8x4xf32, #tpu.memory_space<vmem>>, vector<8x4xf32>
    %cst_88 = arith.constant dense<0.000000e+00> : vector<8x4xf32>
    %199 = tpu.matmul %197, %198, %cst_88 {dimension_numbers = #tpu.dot_dimension_numbers<[1], [0], [0], [1], [0, 0, 1, 1], [], []>} : vector<8x8xf32>, vector<8x4xf32>, vector<8x4xf32> -> vector<8x4xf32>
    %200 = vector.shape_cast %199 : vector<8x4xf32> to vector<1x8x4xf32>
    %c11 = arith.constant 11 : index
    %c0_89 = arith.constant 0 : index
    %201 = vector.load %arg17[%c11, %c0_89] : memref<13x64xf32, #tpu.memory_space<vmem>>, vector<1x4xf32>
    %202 = vector.shape_cast %201 : vector<1x4xf32> to vector<1x1x4xf32>
    %203 = vector.broadcast %202 : vector<1x1x4xf32> to vector<1x8x4xf32>
    %204 = arith.addf %200, %203 : vector<1x8x4xf32>
    %cst_90 = arith.constant 0.000000e+00 : f32
    %205 = vector.broadcast %cst_90 : f32 to vector<1x8x4xf32>
    %206 = arith.maximumf %204, %205 : vector<1x8x4xf32>
    %cst_91 = arith.constant dense<0xFF800000> : vector<1x8xf32>
    %207 = vector.multi_reduction <maximumf>, %206, %cst_91 [2] : vector<1x8x4xf32> to vector<1x8xf32>
    %208 = vector.shape_cast %207 : vector<1x8xf32> to vector<1x8x1xf32>
    %209 = vector.broadcast %208 : vector<1x8x1xf32> to vector<1x8x4xf32>
    %210 = arith.subf %206, %209 : vector<1x8x4xf32>
    %211 = math.exp %210 : vector<1x8x4xf32>
    %cst_92 = arith.constant dense<0.000000e+00> : vector<1x8xf32>
    %212 = vector.multi_reduction <add>, %211, %cst_92 [2] : vector<1x8x4xf32> to vector<1x8xf32>
    %213 = vector.shape_cast %212 : vector<1x8xf32> to vector<1x8x1xf32>
    %214 = tpu.reciprocal %213 {approx = true} : vector<1x8x1xf32> -> vector<1x8x1xf32>
    %215 = vector.broadcast %214 : vector<1x8x1xf32> to vector<1x8x4xf32>
    %216 = arith.mulf %211, %215 : vector<1x8x4xf32>
    %c0_93 = arith.constant 0 : index
    %c0_94 = arith.constant 0 : index
    %c0_95 = arith.constant 0 : index
    %217 = vector.load %arg18[%c0_93, %c0_94, %c0_95] : memref<1x1x256xf32, #tpu.memory_space<vmem>>, vector<1x1x256xf32>
    %218 = vector.shape_cast %217 : vector<1x1x256xf32> to vector<1x256xf32>
    %219 = vector.shape_cast %171 : vector<1x256xf32> to vector<1x1x256xf32>
    tpu.vector_store %arg18[%c0_93, %c0_94, %c0_95], %219 {strides = array<i32>} : memref<1x1x256xf32, #tpu.memory_space<vmem>>, vector<1x1x256xf32>,
    %220 = arith.mulf %194, %1 : vector<1x8x4xf32>
    %cst_96 = arith.constant 1.000000e+00 : f32
    %221 = vector.broadcast %cst_96 : f32 to vector<1x8x4xf32>
    %222 = arith.subf %221, %194 : vector<1x8x4xf32>
    %223 = arith.mulf %222, %216 : vector<1x8x4xf32>
    %224 = arith.addf %220, %223 : vector<1x8x4xf32>
    %c0_97 = arith.constant 0 : index
    %c0_98 = arith.constant 0 : index
    %c0_99 = arith.constant 0 : index
    %225 = vector.load %arg19[%c0_97, %c0_98, %c0_99] : memref<1x8x4xf32, #tpu.memory_space<vmem>>, vector<1x8x4xf32>
    tpu.vector_store %arg19[%c0_97, %c0_98, %c0_99], %224 {strides = array<i32>} : memref<1x8x4xf32, #tpu.memory_space<vmem>>, vector<1x8x4xf32>,
    return
  }
  func.func @transform_0(%arg0: i32) -> (i32, i32, i32) {
    %c0_i32 = arith.constant 0 : i32
    %c0_i32_0 = arith.constant 0 : i32
    %c0_i32_1 = arith.constant 0 : i32
    return %arg0, %c0_i32, %c0_i32_0 : i32, i32, i32
  }
  func.func @transform_1(%arg0: i32) -> (i32, i32, i32) {
    %c0_i32 = arith.constant 0 : i32
    %c0_i32_0 = arith.constant 0 : i32
    %c0_i32_1 = arith.constant 0 : i32
    return %arg0, %c0_i32, %c0_i32_0 : i32, i32, i32
  }
  func.func @transform_2(%arg0: i32) -> (i32, i32, i32) {
    %c0_i32 = arith.constant 0 : i32
    %c0_i32_0 = arith.constant 0 : i32
    %c0_i32_1 = arith.constant 0 : i32
    return %arg0, %c0_i32, %c0_i32_0 : i32, i32, i32
  }
  func.func @transform_3(%arg0: i32) -> (i32, i32, i32) {
    %c0_i32 = arith.constant 0 : i32
    %c0_i32_0 = arith.constant 0 : i32
    %c0_i32_1 = arith.constant 0 : i32
    return %arg0, %c0_i32, %c0_i32_0 : i32, i32, i32
  }
  func.func @transform_4(%arg0: i32) -> (i32, i32, i32) {
    %c0_i32 = arith.constant 0 : i32
    %c0_i32_0 = arith.constant 0 : i32
    %c0_i32_1 = arith.constant 0 : i32
    return %arg0, %c0_i32, %c0_i32_0 : i32, i32, i32
  }
  func.func @transform_5(%arg0: i32) -> (i32, i32, i32) {
    %c0_i32 = arith.constant 0 : i32
    %c0_i32_0 = arith.constant 0 : i32
    %c0_i32_1 = arith.constant 0 : i32
    return %arg0, %c0_i32, %c0_i32_0 : i32, i32, i32
  }
  func.func @transform_6(%arg0: i32) -> (i32, i32, i32) {
    %c0_i32 = arith.constant 0 : i32
    %c0_i32_0 = arith.constant 0 : i32
    %c0_i32_1 = arith.constant 0 : i32
    return %arg0, %c0_i32, %c0_i32_0 : i32, i32, i32
  }
  func.func @transform_7(%arg0: i32) -> (i32, i32) {
    %c0_i32 = arith.constant 0 : i32
    %c0_i32_0 = arith.constant 0 : i32
    %c0_i32_1 = arith.constant 0 : i32
    return %c0_i32, %c0_i32_0 : i32, i32
  }
  func.func @transform_8(%arg0: i32) -> (i32, i32) {
    %c0_i32 = arith.constant 0 : i32
    %c0_i32_0 = arith.constant 0 : i32
    %c0_i32_1 = arith.constant 0 : i32
    return %c0_i32, %c0_i32_0 : i32, i32
  }
  func.func @transform_9(%arg0: i32) -> (i32, i32) {
    %c0_i32 = arith.constant 0 : i32
    %c0_i32_0 = arith.constant 0 : i32
    %c0_i32_1 = arith.constant 0 : i32
    return %c0_i32, %c0_i32_0 : i32, i32
  }
  func.func @transform_10(%arg0: i32) -> (i32, i32) {
    %c0_i32 = arith.constant 0 : i32
    %c0_i32_0 = arith.constant 0 : i32
    %c0_i32_1 = arith.constant 0 : i32
    return %c0_i32, %c0_i32_0 : i32, i32
  }
  func.func @transform_11(%arg0: i32) -> (i32, i32) {
    %c0_i32 = arith.constant 0 : i32
    %c0_i32_0 = arith.constant 0 : i32
    %c0_i32_1 = arith.constant 0 : i32
    return %c0_i32, %c0_i32_0 : i32, i32
  }
  func.func @transform_12(%arg0: i32) -> (i32, i32) {
    %c0_i32 = arith.constant 0 : i32
    %c0_i32_0 = arith.constant 0 : i32
    %c0_i32_1 = arith.constant 0 : i32
    return %c0_i32, %c0_i32_0 : i32, i32
  }
  func.func @transform_13(%arg0: i32) -> (i32, i32) {
    %c0_i32 = arith.constant 0 : i32
    %c0_i32_0 = arith.constant 0 : i32
    %c0_i32_1 = arith.constant 0 : i32
    return %c0_i32, %c0_i32_0 : i32, i32
  }
  func.func @transform_14(%arg0: i32) -> (i32, i32) {
    %c0_i32 = arith.constant 0 : i32
    %c0_i32_0 = arith.constant 0 : i32
    %c0_i32_1 = arith.constant 0 : i32
    return %c0_i32, %c0_i32_0 : i32, i32
  }
  func.func @transform_15(%arg0: i32) -> (i32, i32) {
    %c0_i32 = arith.constant 0 : i32
    %c0_i32_0 = arith.constant 0 : i32
    %c0_i32_1 = arith.constant 0 : i32
    return %c0_i32, %c0_i32_0 : i32, i32
  }
  func.func @transform_16(%arg0: i32) -> (i32, i32) {
    %c0_i32 = arith.constant 0 : i32
    %c0_i32_0 = arith.constant 0 : i32
    %c0_i32_1 = arith.constant 0 : i32
    return %c0_i32, %c0_i32_0 : i32, i32
  }
  func.func @transform_17(%arg0: i32) -> (i32, i32, i32) {
    %c0_i32 = arith.constant 0 : i32
    %c0_i32_0 = arith.constant 0 : i32
    %c0_i32_1 = arith.constant 0 : i32
    return %arg0, %c0_i32, %c0_i32_0 : i32, i32, i32
  }
  func.func @transform_18(%arg0: i32) -> (i32, i32, i32) {
    %c0_i32 = arith.constant 0 : i32
    %c0_i32_0 = arith.constant 0 : i32
    %c0_i32_1 = arith.constant 0 : i32
    return %arg0, %c0_i32, %c0_i32_0 : i32, i32, i32
  }
}

</mosaic_0001>

<llo_original>
// kernel: tpu_custom_call.1
$region0: #{tpu_custom_call.1}
  #allocation0 [shape = 'u32[]', space=smem, size = 0x4, offset = 0x4, fixed_abs, tag = 'smem constant byte address 0x4 - core index']
  #allocation1 [shape = 'u32[144,128]{1,0:T(1,128)}', space=vmem, size = 0x12000, scoped, tag = 'internal scratch']
  %s0 = inlined_call_operand.vmem [shape: f32[2,8,32], index: 0, kind: input, shape index: {}]
  %s1 = inlined_call_operand.vmem [shape: f32[2,8,1], index: 1, kind: input, shape index: {}]
  %s2 = inlined_call_operand.vmem [shape: f32[2,1,32], index: 2, kind: input, shape index: {}]
  %s3 = inlined_call_operand.vmem [shape: f32[2,8,8], index: 3, kind: input, shape index: {}]
  %s4 = inlined_call_operand.vmem [shape: f32[2,8,8], index: 4, kind: input, shape index: {}]
  %s5 = inlined_call_operand.vmem [shape: f32[2,8,4], index: 5, kind: input, shape index: {}]
  %s6 = inlined_call_operand.vmem [shape: f32[2,8,1], index: 6, kind: input, shape index: {}]
  %s7 = inlined_call_operand.vmem [shape: f32[64,32], index: 7, kind: input, shape index: {}]
  %s8 = inlined_call_operand.vmem [shape: f32[32,64], index: 8, kind: input, shape index: {}]
  %s9 = inlined_call_operand.vmem [shape: f32[64,32], index: 9, kind: input, shape index: {}]
  %s10 = inlined_call_operand.vmem [shape: f32[32,64], index: 10, kind: input, shape index: {}]
  %s11 = inlined_call_operand.vmem [shape: f32[4,64], index: 11, kind: input, shape index: {}]
  %s12 = inlined_call_operand.vmem [shape: f32[4,64], index: 12, kind: input, shape index: {}]
  %s13 = inlined_call_operand.vmem [shape: f32[64,8], index: 13, kind: input, shape index: {}]
  %s14 = inlined_call_operand.vmem [shape: f32[256,8], index: 14, kind: input, shape index: {}]
  %s15 = inlined_call_operand.vmem [shape: f32[8,4], index: 15, kind: input, shape index: {}]
  %s16 = inlined_call_operand.vmem [shape: f32[13,64], index: 16, kind: input, shape index: {}]
  %s17 = inlined_call_operand.hbm [shape: f32[2,1,256], index: 17, kind: output, shape index: {0}]
  %s18 = inlined_call_operand.vmem [shape: f32[2,8,4], index: 18, kind: output, shape index: {1}]
  %19 = xla_tuple %s17, %s18
  %s20 = sld [smem:[#allocation0]]
  $region109: #{tpu_custom_call.1} parent=0
    _
  %s22 = ssub.s32 1, %s20
  %s23 = scalar_select 0, %s22, %s20
  $region1: #{tpu_custom_call.1} parent=0
    #allocation2 [shape = 'u8[2048]{0}', space=vmem, size = 0x800, scoped, tag = 'output window, operand 0']
    #allocation3 [shape = 's32[2]{0}', space=sflag, size = 0x8, scoped, tag = 'scoped memory for tpu_custom_call.1']
    %24 = vsyncpa [#allocation3], 0
    %s25 = scalar_lea.sflag [#allocation3], 1
    %26 = vsyncpa %s25, 0
    loop: start=0, step=1, limit=4
    $region2: #{tpu_custom_call.1} parent=1 // loop_pre_header
      _
    $region3: #{tpu_custom_call.1} parent=1 // loop_header
      %s28 = sphi 0, %s32
      %p29 = scmp.ge.s32.totalorder %s28, 4
      %s38 = sphi 0, %s40
      %s41 = sphi 0, %s38
      %s42 = sphi 0, %s41
      %s58 = sphi 0, %s42
      %s64 = sphi 0, %s66
      %s67 = sphi 0, %s64
      %s68 = sphi 0, %s67
      %s84 = sphi 0, %s68
      %s90 = sphi 0, %s92
      %s93 = sphi 0, %s90
      %s94 = sphi 0, %s93
      %s110 = sphi 0, %s94
      %s116 = sphi 0, %s118
      %s119 = sphi 0, %s116
      %s120 = sphi 0, %s119
      %s136 = sphi 0, %s120
      %s142 = sphi 0, %s144
      %s145 = sphi 0, %s142
      %s146 = sphi 0, %s145
      %s162 = sphi 0, %s146
      %s168 = sphi 0, %s170
      %s171 = sphi 0, %s168
      %s172 = sphi 0, %s171
      %s188 = sphi 0, %s172
      %s194 = sphi 0, %s196
      %s197 = sphi 0, %s194
      %s198 = sphi 0, %s197
      %s214 = sphi 0, %s198
      %s218 = sphi 0, %s218
      %s220 = sphi 0, %s218
      %s221 = sphi 0, %s220
      %s235 = sphi 0, %s221
      %s239 = sphi 0, %s239
      %s241 = sphi 0, %s239
      %s242 = sphi 0, %s241
      %s256 = sphi 0, %s242
      %s260 = sphi 0, %s260
      %s262 = sphi 0, %s260
      %s263 = sphi 0, %s262
      %s277 = sphi 0, %s263
      %s281 = sphi 0, %s281
      %s283 = sphi 0, %s281
      %s284 = sphi 0, %s283
      %s298 = sphi 0, %s284
      %s302 = sphi 0, %s302
      %s304 = sphi 0, %s302
      %s305 = sphi 0, %s304
      %s319 = sphi 0, %s305
      %s323 = sphi 0, %s323
      %s325 = sphi 0, %s323
      %s326 = sphi 0, %s325
      %s340 = sphi 0, %s326
      %s344 = sphi 0, %s344
      %s346 = sphi 0, %s344
      %s347 = sphi 0, %s346
      %s361 = sphi 0, %s347
      %s365 = sphi 0, %s365
      %s367 = sphi 0, %s365
      %s368 = sphi 0, %s367
      %s382 = sphi 0, %s368
      %s386 = sphi 0, %s386
      %s388 = sphi 0, %s386
      %s389 = sphi 0, %s388
      %s403 = sphi 0, %s389
      %s407 = sphi 0, %s407
      %s409 = sphi 0, %s407
      %s410 = sphi 0, %s409
      %s424 = sphi 0, %s410
      %s430 = sphi 0, %s432
      %s433 = sphi 0, %s430
      %s434 = sphi 0, %s433
      %s450 = sphi 0, %s434
      %s456 = sphi 0, %s458
      %s459 = sphi 0, %s456
      %s460 = sphi 0, %s459
      %s476 = sphi 0, %s460
    $region4: #{tpu_custom_call.1} parent=1 // loop_header_branch
      %31 = sbr.rel (%p29) target = $region8
    $region5: #{tpu_custom_call.1} parent=1 // loop_body
      %s33 = ssub.s32 %s28, 1
      %s34 = ssub.s32 %s28, 2
      %s35 = sadd.s32 %s28, 1
      %s36 = ssub.s32 %s28, %s35
      %p37 = scmp.eq.s32.totalorder %s36, 0
      %s39 = sadd.s32 %s38, 1
      %s40 = scalar_select %p37, %s38, %s39
      %p43 = pneg %p37
      %p44 = scmp.eq.s32.totalorder %s28, 1
      %p45 = por %p43, %p44
      %p46 = scmp.ne.s32.totalorder %s38, %s41
      %p47 = scmp.eq.s32.totalorder %s28, 0
      %p48 = por %p46, %p47
      %p49 = scmp.ne.s32.totalorder %s38, %s41
      %p50 = scmp.eq.s32.totalorder %s33, 1
      %p51 = por %p49, %p50
      %p52 = scmp.ne.s32.totalorder %s41, %s42
      %p53 = scmp.eq.s32.totalorder %s33, 0
      %p54 = por %p52, %p53
      %p55 = scmp.ne.s32.totalorder %s41, %s42
      %p56 = scmp.eq.s32.totalorder %s34, 1
      %p57 = por %p55, %p56
      %p59 = scmp.ne.s32.totalorder %s42, %s58
      %p60 = scmp.eq.s32.totalorder %s34, 0
      %p61 = por %p59, %p60
      %s62 = ssub.s32 %s28, %s35
      %p63 = scmp.eq.s32.totalorder %s62, 0
      %s65 = sadd.s32 %s64, 1
      %s66 = scalar_select %p63, %s64, %s65
      %p69 = pneg %p63
      %p70 = scmp.eq.s32.totalorder %s28, 1
      %p71 = por %p69, %p70
      %p72 = scmp.ne.s32.totalorder %s64, %s67
      %p73 = scmp.eq.s32.totalorder %s28, 0
      %p74 = por %p72, %p73
      %p75 = scmp.ne.s32.totalorder %s64, %s67
      %p76 = scmp.eq.s32.totalorder %s33, 1
      %p77 = por %p75, %p76
      %p78 = scmp.ne.s32.totalorder %s67, %s68
      %p79 = scmp.eq.s32.totalorder %s33, 0
      %p80 = por %p78, %p79
      %p81 = scmp.ne.s32.totalorder %s67, %s68
      %p82 = scmp.eq.s32.totalorder %s34, 1
      %p83 = por %p81, %p82
      %p85 = scmp.ne.s32.totalorder %s68, %s84
      %p86 = scmp.eq.s32.totalorder %s34, 0
      %p87 = por %p85, %p86
      %s88 = ssub.s32 %s28, %s35
      %p89 = scmp.eq.s32.totalorder %s88, 0
      %s91 = sadd.s32 %s90, 1
      %s92 = scalar_select %p89, %s90, %s91
      %p95 = pneg %p89
      %p96 = scmp.eq.s32.totalorder %s28, 1
      %p97 = por %p95, %p96
      %p98 = scmp.ne.s32.totalorder %s90, %s93
      %p99 = scmp.eq.s32.totalorder %s28, 0
      %p100 = por %p98, %p99
      %p101 = scmp.ne.s32.totalorder %s90, %s93
      %p102 = scmp.eq.s32.totalorder %s33, 1
      %p103 = por %p101, %p102
      %p104 = scmp.ne.s32.totalorder %s93, %s94
      %p105 = scmp.eq.s32.totalorder %s33, 0
      %p106 = por %p104, %p105
      %p107 = scmp.ne.s32.totalorder %s93, %s94
      %p108 = scmp.eq.s32.totalorder %s34, 1
      %p109 = por %p107, %p108
      %p111 = scmp.ne.s32.totalorder %s94, %s110
      %p112 = scmp.eq.s32.totalorder %s34, 0
      %p113 = por %p111, %p112
      %s114 = ssub.s32 %s28, %s35
      %p115 = scmp.eq.s32.totalorder %s114, 0
      %s117 = sadd.s32 %s116, 1
      %s118 = scalar_select %p115, %s116, %s117
      %p121 = pneg %p115
      %p122 = scmp.eq.s32.totalorder %s28, 1
      %p123 = por %p121, %p122
      %p124 = scmp.ne.s32.totalorder %s116, %s119
      %p125 = scmp.eq.s32.totalorder %s28, 0
      %p126 = por %p124, %p125
      %p127 = scmp.ne.s32.totalorder %s116, %s119
      %p128 = scmp.eq.s32.totalorder %s33, 1
      %p129 = por %p127, %p128
      %p130 = scmp.ne.s32.totalorder %s119, %s120
      %p131 = scmp.eq.s32.totalorder %s33, 0
      %p132 = por %p130, %p131
      %p133 = scmp.ne.s32.totalorder %s119, %s120
      %p134 = scmp.eq.s32.totalorder %s34, 1
      %p135 = por %p133, %p134
      %p137 = scmp.ne.s32.totalorder %s120, %s136
      %p138 = scmp.eq.s32.totalorder %s34, 0
      %p139 = por %p137, %p138
      %s140 = ssub.s32 %s28, %s35
      %p141 = scmp.eq.s32.totalorder %s140, 0
      %s143 = sadd.s32 %s142, 1
      %s144 = scalar_select %p141, %s142, %s143
      %p147 = pneg %p141
      %p148 = scmp.eq.s32.totalorder %s28, 1
      %p149 = por %p147, %p148
      %p150 = scmp.ne.s32.totalorder %s142, %s145
      %p151 = scmp.eq.s32.totalorder %s28, 0
      %p152 = por %p150, %p151
      %p153 = scmp.ne.s32.totalorder %s142, %s145
      %p154 = scmp.eq.s32.totalorder %s33, 1
      %p155 = por %p153, %p154
      %p156 = scmp.ne.s32.totalorder %s145, %s146
      %p157 = scmp.eq.s32.totalorder %s33, 0
      %p158 = por %p156, %p157
      %p159 = scmp.ne.s32.totalorder %s145, %s146
      %p160 = scmp.eq.s32.totalorder %s34, 1
      %p161 = por %p159, %p160
      %p163 = scmp.ne.s32.totalorder %s146, %s162
      %p164 = scmp.eq.s32.totalorder %s34, 0
      %p165 = por %p163, %p164
      %s166 = ssub.s32 %s28, %s35
      %p167 = scmp.eq.s32.totalorder %s166, 0
      %s169 = sadd.s32 %s168, 1
      %s170 = scalar_select %p167, %s168, %s169
      %p173 = pneg %p167
      %p174 = scmp.eq.s32.totalorder %s28, 1
      %p175 = por %p173, %p174
      %p176 = scmp.ne.s32.totalorder %s168, %s171
      %p177 = scmp.eq.s32.totalorder %s28, 0
      %p178 = por %p176, %p177
      %p179 = scmp.ne.s32.totalorder %s168, %s171
      %p180 = scmp.eq.s32.totalorder %s33, 1
      %p181 = por %p179, %p180
      %p182 = scmp.ne.s32.totalorder %s171, %s172
      %p183 = scmp.eq.s32.totalorder %s33, 0
      %p184 = por %p182, %p183
      %p185 = scmp.ne.s32.totalorder %s171, %s172
      %p186 = scmp.eq.s32.totalorder %s34, 1
      %p187 = por %p185, %p186
      %p189 = scmp.ne.s32.totalorder %s172, %s188
      %p190 = scmp.eq.s32.totalorder %s34, 0
      %p191 = por %p189, %p190
      %s192 = ssub.s32 %s28, %s35
      %p193 = scmp.eq.s32.totalorder %s192, 0
      %s195 = sadd.s32 %s194, 1
      %s196 = scalar_select %p193, %s194, %s195
      %p199 = pneg %p193
      %p200 = scmp.eq.s32.totalorder %s28, 1
      %p201 = por %p199, %p200
      %p202 = scmp.ne.s32.totalorder %s194, %s197
      %p203 = scmp.eq.s32.totalorder %s28, 0
      %p204 = por %p202, %p203
      %p205 = scmp.ne.s32.totalorder %s194, %s197
      %p206 = scmp.eq.s32.totalorder %s33, 1
      %p207 = por %p205, %p206
      %p208 = scmp.ne.s32.totalorder %s197, %s198
      %p209 = scmp.eq.s32.totalorder %s33, 0
      %p210 = por %p208, %p209
      %p211 = scmp.ne.s32.totalorder %s197, %s198
      %p212 = scmp.eq.s32.totalorder %s34, 1
      %p213 = por %p211, %p212
      %p215 = scmp.ne.s32.totalorder %s198, %s214
      %p216 = scmp.eq.s32.totalorder %s34, 0
      %p217 = por %p215, %p216
      %s219 = sadd.s32 %s218, 1
      %p222 = scmp.eq.s32.totalorder %s28, 1
      %p223 = scmp.ne.s32.totalorder %s218, %s220
      %p224 = scmp.eq.s32.totalorder %s28, 0
      %p225 = por %p223, %p224
      %p226 = scmp.ne.s32.totalorder %s218, %s220
      %p227 = scmp.eq.s32.totalorder %s33, 1
      %p228 = por %p226, %p227
      %p229 = scmp.ne.s32.totalorder %s220, %s221
      %p230 = scmp.eq.s32.totalorder %s33, 0
      %p231 = por %p229, %p230
      %p232 = scmp.ne.s32.totalorder %s220, %s221
      %p233 = scmp.eq.s32.totalorder %s34, 1
      %p234 = por %p232, %p233
      %p236 = scmp.ne.s32.totalorder %s221, %s235
      %p237 = scmp.eq.s32.totalorder %s34, 0
      %p238 = por %p236, %p237
      %s240 = sadd.s32 %s239, 1
      %p243 = scmp.eq.s32.totalorder %s28, 1
      %p244 = scmp.ne.s32.totalorder %s239, %s241
      %p245 = scmp.eq.s32.totalorder %s28, 0
      %p246 = por %p244, %p245
      %p247 = scmp.ne.s32.totalorder %s239, %s241
      %p248 = scmp.eq.s32.totalorder %s33, 1
      %p249 = por %p247, %p248
      %p250 = scmp.ne.s32.totalorder %s241, %s242
      %p251 = scmp.eq.s32.totalorder %s33, 0
      %p252 = por %p250, %p251
      %p253 = scmp.ne.s32.totalorder %s241, %s242
      %p254 = scmp.eq.s32.totalorder %s34, 1
      %p255 = por %p253, %p254
      %p257 = scmp.ne.s32.totalorder %s242, %s256
      %p258 = scmp.eq.s32.totalorder %s34, 0
      %p259 = por %p257, %p258
      %s261 = sadd.s32 %s260, 1
      %p264 = scmp.eq.s32.totalorder %s28, 1
      %p265 = scmp.ne.s32.totalorder %s260, %s262
      %p266 = scmp.eq.s32.totalorder %s28, 0
      %p267 = por %p265, %p266
      %p268 = scmp.ne.s32.totalorder %s260, %s262
      %p269 = scmp.eq.s32.totalorder %s33, 1
      %p270 = por %p268, %p269
      %p271 = scmp.ne.s32.totalorder %s262, %s263
      %p272 = scmp.eq.s32.totalorder %s33, 0
      %p273 = por %p271, %p272
      %p274 = scmp.ne.s32.totalorder %s262, %s263
      %p275 = scmp.eq.s32.totalorder %s34, 1
      %p276 = por %p274, %p275
      %p278 = scmp.ne.s32.totalorder %s263, %s277
      %p279 = scmp.eq.s32.totalorder %s34, 0
      %p280 = por %p278, %p279
      %s282 = sadd.s32 %s281, 1
      %p285 = scmp.eq.s32.totalorder %s28, 1
      %p286 = scmp.ne.s32.totalorder %s281, %s283
      %p287 = scmp.eq.s32.totalorder %s28, 0
      %p288 = por %p286, %p287
      %p289 = scmp.ne.s32.totalorder %s281, %s283
      %p290 = scmp.eq.s32.totalorder %s33, 1
      %p291 = por %p289, %p290
      %p292 = scmp.ne.s32.totalorder %s283, %s284
      %p293 = scmp.eq.s32.totalorder %s33, 0
      %p294 = por %p292, %p293
      %p295 = scmp.ne.s32.totalorder %s283, %s284
      %p296 = scmp.eq.s32.totalorder %s34, 1
      %p297 = por %p295, %p296
      %p299 = scmp.ne.s32.totalorder %s284, %s298
      %p300 = scmp.eq.s32.totalorder %s34, 0
      %p301 = por %p299, %p300
      %s303 = sadd.s32 %s302, 1
      %p306 = scmp.eq.s32.totalorder %s28, 1
      %p307 = scmp.ne.s32.totalorder %s302, %s304
      %p308 = scmp.eq.s32.totalorder %s28, 0
      %p309 = por %p307, %p308
      %p310 = scmp.ne.s32.totalorder %s302, %s304
      %p311 = scmp.eq.s32.totalorder %s33, 1
      %p312 = por %p310, %p311
      %p313 = scmp.ne.s32.totalorder %s304, %s305
      %p314 = scmp.eq.s32.totalorder %s33, 0
      %p315 = por %p313, %p314
      %p316 = scmp.ne.s32.totalorder %s304, %s305
      %p317 = scmp.eq.s32.totalorder %s34, 1
      %p318 = por %p316, %p317
      %p320 = scmp.ne.s32.totalorder %s305, %s319
      %p321 = scmp.eq.s32.totalorder %s34, 0
      %p322 = por %p320, %p321
      %s324 = sadd.s32 %s323, 1
      %p327 = scmp.eq.s32.totalorder %s28, 1
      %p328 = scmp.ne.s32.totalorder %s323, %s325
      %p329 = scmp.eq.s32.totalorder %s28, 0
      %p330 = por %p328, %p329
      %p331 = scmp.ne.s32.totalorder %s323, %s325
      %p332 = scmp.eq.s32.totalorder %s33, 1
      %p333 = por %p331, %p332
      %p334 = scmp.ne.s32.totalorder %s325, %s326
      %p335 = scmp.eq.s32.totalorder %s33, 0
      %p336 = por %p334, %p335
      %p337 = scmp.ne.s32.totalorder %s325, %s326
      %p338 = scmp.eq.s32.totalorder %s34, 1
      %p339 = por %p337, %p338
      %p341 = scmp.ne.s32.totalorder %s326, %s340
      %p342 = scmp.eq.s32.totalorder %s34, 0
      %p343 = por %p341, %p342
      %s345 = sadd.s32 %s344, 1
      %p348 = scmp.eq.s32.totalorder %s28, 1
      %p349 = scmp.ne.s32.totalorder %s344, %s346
      %p350 = scmp.eq.s32.totalorder %s28, 0
      %p351 = por %p349, %p350
      %p352 = scmp.ne.s32.totalorder %s344, %s346
      %p353 = scmp.eq.s32.totalorder %s33, 1
      %p354 = por %p352, %p353
      %p355 = scmp.ne.s32.totalorder %s346, %s347
      %p356 = scmp.eq.s32.totalorder %s33, 0
      %p357 = por %p355, %p356
      %p358 = scmp.ne.s32.totalorder %s346, %s347
      %p359 = scmp.eq.s32.totalorder %s34, 1
      %p360 = por %p358, %p359
      %p362 = scmp.ne.s32.totalorder %s347, %s361
      %p363 = scmp.eq.s32.totalorder %s34, 0
      %p364 = por %p362, %p363
      %s366 = sadd.s32 %s365, 1
      %p369 = scmp.eq.s32.totalorder %s28, 1
      %p370 = scmp.ne.s32.totalorder %s365, %s367
      %p371 = scmp.eq.s32.totalorder %s28, 0
      %p372 = por %p370, %p371
      %p373 = scmp.ne.s32.totalorder %s365, %s367
      %p374 = scmp.eq.s32.totalorder %s33, 1
      %p375 = por %p373, %p374
      %p376 = scmp.ne.s32.totalorder %s367, %s368
      %p377 = scmp.eq.s32.totalorder %s33, 0
      %p378 = por %p376, %p377
      %p379 = scmp.ne.s32.totalorder %s367, %s368
      %p380 = scmp.eq.s32.totalorder %s34, 1
      %p381 = por %p379, %p380
      %p383 = scmp.ne.s32.totalorder %s368, %s382
      %p384 = scmp.eq.s32.totalorder %s34, 0
      %p385 = por %p383, %p384
      %s387 = sadd.s32 %s386, 1
      %p390 = scmp.eq.s32.totalorder %s28, 1
      %p391 = scmp.ne.s32.totalorder %s386, %s388
      %p392 = scmp.eq.s32.totalorder %s28, 0
      %p393 = por %p391, %p392
      %p394 = scmp.ne.s32.totalorder %s386, %s388
      %p395 = scmp.eq.s32.totalorder %s33, 1
      %p396 = por %p394, %p395
      %p397 = scmp.ne.s32.totalorder %s388, %s389
      %p398 = scmp.eq.s32.totalorder %s33, 0
      %p399 = por %p397, %p398
      %p400 = scmp.ne.s32.totalorder %s388, %s389
      %p401 = scmp.eq.s32.totalorder %s34, 1
      %p402 = por %p400, %p401
      %p404 = scmp.ne.s32.totalorder %s389, %s403
      %p405 = scmp.eq.s32.totalorder %s34, 0
      %p406 = por %p404, %p405
      %s408 = sadd.s32 %s407, 1
      %p411 = scmp.eq.s32.totalorder %s28, 1
      %p412 = scmp.ne.s32.totalorder %s407, %s409
      %p413 = scmp.eq.s32.totalorder %s28, 0
      %p414 = por %p412, %p413
      %p415 = scmp.ne.s32.totalorder %s407, %s409
      %p416 = scmp.eq.s32.totalorder %s33, 1
      %p417 = por %p415, %p416
      %p418 = scmp.ne.s32.totalorder %s409, %s410
      %p419 = scmp.eq.s32.totalorder %s33, 0
      %p420 = por %p418, %p419
      %p421 = scmp.ne.s32.totalorder %s409, %s410
      %p422 = scmp.eq.s32.totalorder %s34, 1
      %p423 = por %p421, %p422
      %p425 = scmp.ne.s32.totalorder %s410, %s424
      %p426 = scmp.eq.s32.totalorder %s34, 0
      %p427 = por %p425, %p426
      %s428 = ssub.s32 %s28, %s35
      %p429 = scmp.eq.s32.totalorder %s428, 0
      %s431 = sadd.s32 %s430, 1
      %s432 = scalar_select %p429, %s430, %s431
      %p435 = pneg %p429
      %p436 = scmp.eq.s32.totalorder %s28, 1
      %p437 = por %p435, %p436
      %p438 = scmp.ne.s32.totalorder %s430, %s433
      %p439 = scmp.eq.s32.totalorder %s28, 0
      %p440 = por %p438, %p439
      %p441 = scmp.ne.s32.totalorder %s430, %s433
      %p442 = scmp.eq.s32.totalorder %s33, 1
      %p443 = por %p441, %p442
      %p444 = scmp.ne.s32.totalorder %s433, %s434
      %p445 = scmp.eq.s32.totalorder %s33, 0
      %p446 = por %p444, %p445
      %p447 = scmp.ne.s32.totalorder %s433, %s434
      %p448 = scmp.eq.s32.totalorder %s34, 1
      %p449 = por %p447, %p448
      %p451 = scmp.ne.s32.totalorder %s434, %s450
      %p452 = scmp.eq.s32.totalorder %s34, 0
      %p453 = por %p451, %p452
      %s454 = ssub.s32 %s28, %s35
      %p455 = scmp.eq.s32.totalorder %s454, 0
      %s457 = sadd.s32 %s456, 1
      %s458 = scalar_select %p455, %s456, %s457
      %p461 = pneg %p455
      %p462 = scmp.eq.s32.totalorder %s28, 1
      %p463 = por %p461, %p462
      %p464 = scmp.ne.s32.totalorder %s456, %s459
      %p465 = scmp.eq.s32.totalorder %s28, 0
      %p466 = por %p464, %p465
      %p467 = scmp.ne.s32.totalorder %s456, %s459
      %p468 = scmp.eq.s32.totalorder %s33, 1
      %p469 = por %p467, %p468
      %p470 = scmp.ne.s32.totalorder %s459, %s460
      %p471 = scmp.eq.s32.totalorder %s33, 0
      %p472 = por %p470, %p471
      %p473 = scmp.ne.s32.totalorder %s459, %s460
      %p474 = scmp.eq.s32.totalorder %s34, 1
      %p475 = por %p473, %p474
      %p477 = scmp.ne.s32.totalorder %s460, %s476
      %p478 = scmp.eq.s32.totalorder %s34, 0
      %p479 = por %p477, %p478
      %p480 = scmp.le.s32.totalorder 1, %s28
      %p481 = scmp.lt.s32.totalorder %s28, 3
      %p482 = pnand %p480, %p481
      %p483 = pneg %p482
      // Predicated region
      $region9: #{tpu_custom_call.1} parent=5 // pred_check
        _
      $region10: #{tpu_custom_call.1} parent=5 // pred_check_branch
        %485 = sbr.rel (%p482) target = $region12
      $region11: #{tpu_custom_call.1} parent=5 // pred_region
        %s486 = ssub.s32 %s28, 1
        // Predicated region
        $region13: #{tpu_custom_call.1} parent=11 // pred_check
          %p487 = pneg %p231
        $region14: #{tpu_custom_call.1} parent=11 // pred_check_branch
          %489 = sbr.rel (%p487) target = $region16
        $region15: #{tpu_custom_call.1} parent=11 // pred_region
          _
        $region16: #{tpu_custom_call.1} parent=11 // pred_fallthru
          _
        // Predicated region
        $region17: #{tpu_custom_call.1} parent=11 // pred_check
          %p490 = pneg %p252
        $region18: #{tpu_custom_call.1} parent=11 // pred_check_branch
          %492 = sbr.rel (%p490) target = $region20
        $region19: #{tpu_custom_call.1} parent=11 // pred_region
          _
        $region20: #{tpu_custom_call.1} parent=11 // pred_fallthru
          _
        // Predicated region
        $region21: #{tpu_custom_call.1} parent=11 // pred_check
          %p493 = pneg %p273
        $region22: #{tpu_custom_call.1} parent=11 // pred_check_branch
          %495 = sbr.rel (%p493) target = $region24
        $region23: #{tpu_custom_call.1} parent=11 // pred_region
          _
        $region24: #{tpu_custom_call.1} parent=11 // pred_fallthru
          _
        // Predicated region
        $region25: #{tpu_custom_call.1} parent=11 // pred_check
          %p496 = pneg %p294
        $region26: #{tpu_custom_call.1} parent=11 // pred_check_branch
          %498 = sbr.rel (%p496) target = $region28
        $region27: #{tpu_custom_call.1} parent=11 // pred_region
          _
        $region28: #{tpu_custom_call.1} parent=11 // pred_fallthru
          _
        // Predicated region
        $region29: #{tpu_custom_call.1} parent=11 // pred_check
          %p499 = pneg %p315
        $region30: #{tpu_custom_call.1} parent=11 // pred_check_branch
          %501 = sbr.rel (%p499) target = $region32
        $region31: #{tpu_custom_call.1} parent=11 // pred_region
          _
        $region32: #{tpu_custom_call.1} parent=11 // pred_fallthru
          _
        // Predicated region
        $region33: #{tpu_custom_call.1} parent=11 // pred_check
          %p502 = pneg %p336
        $region34: #{tpu_custom_call.1} parent=11 // pred_check_branch
          %504 = sbr.rel (%p502) target = $region36
        $region35: #{tpu_custom_call.1} parent=11 // pred_region
          _
        $region36: #{tpu_custom_call.1} parent=11 // pred_fallthru
          _
        // Predicated region
        $region37: #{tpu_custom_call.1} parent=11 // pred_check
          %p505 = pneg %p357
        $region38: #{tpu_custom_call.1} parent=11 // pred_check_branch
          %507 = sbr.rel (%p505) target = $region40
        $region39: #{tpu_custom_call.1} parent=11 // pred_region
          _
        $region40: #{tpu_custom_call.1} parent=11 // pred_fallthru
          _
        // Predicated region
        $region41: #{tpu_custom_call.1} parent=11 // pred_check
          %p508 = pneg %p378
        $region42: #{tpu_custom_call.1} parent=11 // pred_check_branch
          %510 = sbr.rel (%p508) target = $region44
        $region43: #{tpu_custom_call.1} parent=11 // pred_region
          _
        $region44: #{tpu_custom_call.1} parent=11 // pred_fallthru
          _
        // Predicated region
        $region45: #{tpu_custom_call.1} parent=11 // pred_check
          %p511 = pneg %p399
        $region46: #{tpu_custom_call.1} parent=11 // pred_check_branch
          %513 = sbr.rel (%p511) target = $region48
        $region47: #{tpu_custom_call.1} parent=11 // pred_region
          _
        $region48: #{tpu_custom_call.1} parent=11 // pred_fallthru
          _
        // Predicated region
        $region49: #{tpu_custom_call.1} parent=11 // pred_check
          %p514 = pneg %p420
        $region50: #{tpu_custom_call.1} parent=11 // pred_check_branch
          %516 = sbr.rel (%p514) target = $region52
        $region51: #{tpu_custom_call.1} parent=11 // pred_region
          _
        $region52: #{tpu_custom_call.1} parent=11 // pred_fallthru
          _
      $region12: #{tpu_custom_call.1} parent=5 // pred_fallthru
        _
      %p517 = scmp.lt.s32.totalorder %s28, 2
      // Predicated region
      $region53: #{tpu_custom_call.1} parent=5 // pred_check
        %p518 = pneg %p517
      $region54: #{tpu_custom_call.1} parent=5 // pred_check_branch
        %520 = sbr.rel (%p518) target = $region56
      $region55: #{tpu_custom_call.1} parent=5 // pred_region
        // Predicated region
        $region57: #{tpu_custom_call.1} parent=55 // pred_check
          %p521 = pneg %p48
        $region58: #{tpu_custom_call.1} parent=55 // pred_check_branch
          %523 = sbr.rel (%p521) target = $region60
        $region59: #{tpu_custom_call.1} parent=55 // pred_region
          %p524 = scmp.lt.s32.totalorder %s28, 1
          %s525 = scalar_select %p524, %s28, 1
          %s526 = smul.addr %s525, 8
          %s527 = scalar_lea.vmem %s0, %s526
        $region60: #{tpu_custom_call.1} parent=55 // pred_fallthru
          _
        // Predicated region
        $region61: #{tpu_custom_call.1} parent=55 // pred_check
          %p528 = pneg %p74
        $region62: #{tpu_custom_call.1} parent=55 // pred_check_branch
          %530 = sbr.rel (%p528) target = $region64
        $region63: #{tpu_custom_call.1} parent=55 // pred_region
          %p531 = scmp.lt.s32.totalorder %s28, 1
          %s532 = scalar_select %p531, %s28, 1
          %s533 = smul.addr %s532, 8
          %s534 = scalar_lea.vmem %s1, %s533
        $region64: #{tpu_custom_call.1} parent=55 // pred_fallthru
          _
        // Predicated region
        $region65: #{tpu_custom_call.1} parent=55 // pred_check
          %p535 = pneg %p100
        $region66: #{tpu_custom_call.1} parent=55 // pred_check_branch
          %537 = sbr.rel (%p535) target = $region68
        $region67: #{tpu_custom_call.1} parent=55 // pred_region
          %p538 = scmp.lt.s32.totalorder %s28, 1
          %s539 = scalar_select %p538, %s28, 1
          %s540 = scalar_lea.vmem %s2, %s539
        $region68: #{tpu_custom_call.1} parent=55 // pred_fallthru
          _
        // Predicated region
        $region69: #{tpu_custom_call.1} parent=55 // pred_check
          %p541 = pneg %p126
        $region70: #{tpu_custom_call.1} parent=55 // pred_check_branch
          %543 = sbr.rel (%p541) target = $region72
        $region71: #{tpu_custom_call.1} parent=55 // pred_region
          %p544 = scmp.lt.s32.totalorder %s28, 1
          %s545 = scalar_select %p544, %s28, 1
          %s546 = smul.addr %s545, 8
          %s547 = scalar_lea.vmem %s3, %s546
        $region72: #{tpu_custom_call.1} parent=55 // pred_fallthru
          _
        // Predicated region
        $region73: #{tpu_custom_call.1} parent=55 // pred_check
          %p548 = pneg %p152
        $region74: #{tpu_custom_call.1} parent=55 // pred_check_branch
          %550 = sbr.rel (%p548) target = $region76
        $region75: #{tpu_custom_call.1} parent=55 // pred_region
          %p551 = scmp.lt.s32.totalorder %s28, 1
          %s552 = scalar_select %p551, %s28, 1
          %s553 = smul.addr %s552, 8
          %s554 = scalar_lea.vmem %s4, %s553
        $region76: #{tpu_custom_call.1} parent=55 // pred_fallthru
          _
        // Predicated region
        $region77: #{tpu_custom_call.1} parent=55 // pred_check
          %p555 = pneg %p178
        $region78: #{tpu_custom_call.1} parent=55 // pred_check_branch
          %557 = sbr.rel (%p555) target = $region80
        $region79: #{tpu_custom_call.1} parent=55 // pred_region
          %p558 = scmp.lt.s32.totalorder %s28, 1
          %s559 = scalar_select %p558, %s28, 1
          %s560 = smul.addr %s559, 8
          %s561 = scalar_lea.vmem %s5, %s560
        $region80: #{tpu_custom_call.1} parent=55 // pred_fallthru
          _
        // Predicated region
        $region81: #{tpu_custom_call.1} parent=55 // pred_check
          %p562 = pneg %p204
        $region82: #{tpu_custom_call.1} parent=55 // pred_check_branch
          %564 = sbr.rel (%p562) target = $region84
        $region83: #{tpu_custom_call.1} parent=55 // pred_region
          %p565 = scmp.lt.s32.totalorder %s28, 1
          %s566 = scalar_select %p565, %s28, 1
          %s567 = smul.addr %s566, 8
          %s568 = scalar_lea.vmem %s6, %s567
        $region84: #{tpu_custom_call.1} parent=55 // pred_fallthru
          _
      $region56: #{tpu_custom_call.1} parent=5 // pred_fallthru
        _
      %p569 = scmp.le.s32.totalorder 1, %s28
      %p570 = scmp.lt.s32.totalorder %s28, 3
      %p571 = pnand %p569, %p570
      %p572 = pneg %p571
      // Predicated region
      $region85: #{tpu_custom_call.1} parent=5 // pred_check
        _
      $region86: #{tpu_custom_call.1} parent=5 // pred_check_branch
        %574 = sbr.rel (%p571) target = $region88
      $region87: #{tpu_custom_call.1} parent=5 // pred_region
        %s575 = ssub.s32 %s28, 1
        %p576 = scmp.lt.s32.totalorder %s33, 1
        %s577 = scalar_select %p576, %s33, 1
        %s578 = smul.addr %s577, 8
        %s579 = scalar_lea.vmem %s0, %s578
        %p580 = pneg %p54
        %p581 = pneg %p51
        %p582 = scmp.lt.s32.totalorder %s33, 1
        %s583 = scalar_select %p582, %s33, 1
        %s584 = smul.addr %s583, 8
        %s585 = scalar_lea.vmem %s1, %s584
        %p586 = pneg %p80
        %p587 = pneg %p77
        %p588 = scmp.lt.s32.totalorder %s33, 1
        %s589 = scalar_select %p588, %s33, 1
        %s590 = scalar_lea.vmem %s2, %s589
        %p591 = pneg %p106
        %p592 = pneg %p103
        %p593 = scmp.lt.s32.totalorder %s33, 1
        %s594 = scalar_select %p593, %s33, 1
        %s595 = smul.addr %s594, 8
        %s596 = scalar_lea.vmem %s3, %s595
        %p597 = pneg %p132
        %p598 = pneg %p129
        %p599 = scmp.lt.s32.totalorder %s33, 1
        %s600 = scalar_select %p599, %s33, 1
        %s601 = smul.addr %s600, 8
        %s602 = scalar_lea.vmem %s4, %s601
        %p603 = pneg %p158
        %p604 = pneg %p155
        %p605 = scmp.lt.s32.totalorder %s33, 1
        %s606 = scalar_select %p605, %s33, 1
        %s607 = smul.addr %s606, 8
        %s608 = scalar_lea.vmem %s5, %s607
        %p609 = pneg %p184
        %p610 = pneg %p181
        %p611 = scmp.lt.s32.totalorder %s33, 1
        %s612 = scalar_select %p611, %s33, 1
        %s613 = smul.addr %s612, 8
        %s614 = scalar_lea.vmem %s6, %s613
        %p615 = pneg %p210
        %p616 = pneg %p207
        %p617 = pneg %p231
        %p618 = pneg %p228
        %p619 = pneg %p252
        %p620 = pneg %p249
        %p621 = pneg %p273
        %p622 = pneg %p270
        %p623 = pneg %p294
        %p624 = pneg %p291
        %p625 = pneg %p315
        %p626 = pneg %p312
        %p627 = pneg %p336
        %p628 = pneg %p333
        %p629 = pneg %p357
        %p630 = pneg %p354
        %p631 = pneg %p378
        %p632 = pneg %p375
        %p633 = pneg %p399
        %p634 = pneg %p396
        %p635 = pneg %p420
        %p636 = pneg %p417
        %p637 = pneg %p446
        %p638 = pneg %p443
        %s639 = sand.u32 %s433, 1
        %s640 = scalar_lea.sflag [#allocation3], %s639
        %s641 = sand.u32 %s433, 1
        %s642 = smul.addr %s641, 2
        %s643 = scalar_lea.vmem [#allocation2], %s642
        %p644 = pneg %p472
        %p645 = pneg %p469
        %p646 = scmp.lt.s32.totalorder %s33, 1
        %s647 = scalar_select %p646, %s33, 1
        %s648 = smul.addr %s647, 8
        %s649 = scalar_lea.vmem %s18, %s648
        %p650 = scmp.lt.s32.totalorder %s33, 1
        %s651 = scalar_select %p650, %s33, 1
        %s652 = smul.addr %s651, 8
        %s653 = scalar_lea.vmem %s0, %s652
        %p654 = scmp.lt.s32.totalorder %s33, 1
        %s655 = scalar_select %p654, %s33, 1
        %s656 = smul.addr %s655, 8
        %s657 = scalar_lea.vmem %s1, %s656
        %p658 = scmp.lt.s32.totalorder %s33, 1
        %s659 = scalar_select %p658, %s33, 1
        %s660 = scalar_lea.vmem %s2, %s659
        %p661 = scmp.lt.s32.totalorder %s33, 1
        %s662 = scalar_select %p661, %s33, 1
        %s663 = smul.addr %s662, 8
        %s664 = scalar_lea.vmem %s3, %s663
        %p665 = scmp.lt.s32.totalorder %s33, 1
        %s666 = scalar_select %p665, %s33, 1
        %s667 = smul.addr %s666, 8
        %s668 = scalar_lea.vmem %s4, %s667
        %p669 = scmp.lt.s32.totalorder %s33, 1
        %s670 = scalar_select %p669, %s33, 1
        %s671 = smul.addr %s670, 8
        %s672 = scalar_lea.vmem %s5, %s671
        %p673 = scmp.lt.s32.totalorder %s33, 1
        %s674 = scalar_select %p673, %s33, 1
        %s675 = smul.addr %s674, 8
        %s676 = scalar_lea.vmem %s6, %s675
        %p677 = scmp.lt.s32.totalorder %s33, 1
        %s678 = scalar_select %p677, %s33, 1
        %s679 = smul.addr %s678, 8
        %s680 = scalar_lea.vmem %s18, %s679
        %v681 = vld [vmem:[%s653] sm:$0xff]
        %v682 = vld [vmem:[%s672] sm:$0xff]
        %v683 = vld [vmem:[%s657] sm:$0xff]
        %v684 = vld [vmem:[%s660] sm:$0x1]
        %686 = vset.pattern.permute.xlu0 0
        %687 = vperm.xlu0 %686, %v683
        %v688 = vpop.permute.xlu0 %687
        %v691 = vlaneseq
        %v692 = vshrl.u32 %v691, 7
        %v693 = vsub.s32 0, %v692
        %v694 = vrot.slane %v684, %v693
        %v696 = vmul.f32 %v688, %v694
        %698 = vrot.lane.b32.xlu0 %v681, 32
        %v699 = vpop.permute.xlu0 %698
        %vm701 = vcmask 261120
        %v702 = vsel %vm701, %v696, %v699
        %v703 = vld [vmem:[%s668] sm:$0xff]
        %vm704 = vcmp.eq.f32.partialorder %v703, 1.0
        %v705 = vld [vmem:[%s664] sm:$0xff]
        %v706 = vsel %vm704, %v705, 0.0
        %v707 = vld [vmem:[%s7] sm:$0xff]
        %v708 = vld [vmem:[%s7 + $0x8] sm:$0xff]
        %v709 = vld [vmem:[%s7 + $0x10] sm:$0xff]
        %v710 = vld [vmem:[%s7 + $0x18] sm:$0xff]
        %v711 = vld [vmem:[%s7 + $0x20] sm:$0xff]
        %v712 = vld [vmem:[%s7 + $0x28] sm:$0xff]
        %v713 = vld [vmem:[%s7 + $0x30] sm:$0xff]
        %v714 = vld [vmem:[%s7 + $0x38] sm:$0xff]
        %vm715 = vcmask 523264
        %v717 = vsel %vm715, %v702, 0
        %719 = vmatprep.subr.mxu0 0.0
        %720 = vmatpush1.msra.mxu0 0.0
        %721 = vmatprep.subr.mxu0 0.0
        %722 = vmatpush1.msra.mxu0 0.0
        %723 = vmatprep.subr.mxu0 0.0
        %724 = vmatpush1.msra.mxu0 0.0
        %725 = vmatprep.subr.mxu0 0.0
        %726 = vmatpush1.msra.mxu0 0.0
        %727 = vmatprep.subr.mxu0 0.0
        %728 = vmatpush1.msra.mxu0 0.0
        %729 = vmatprep.subr.mxu0 0.0
        %730 = vmatpush1.msra.mxu0 0.0
        %731 = vmatprep.subr.mxu0 0.0
        %732 = vmatpush1.msra.mxu0 0.0
        %733 = vmatprep.subr.mxu0 0.0
        %734 = vmatpush1.msra.mxu0 0.0
        %735 = vmatprep.subr.mxu0 0.0
        %736 = vmatpush1.msra.mxu0 %v714
        %737 = vmatprep.subr.mxu0 0.0
        %738 = vmatpush1.msra.mxu0 %v713
        %739 = vmatprep.subr.mxu0 0.0
        %740 = vmatpush1.msra.mxu0 %v712
        %741 = vmatprep.subr.mxu0 0.0
        %742 = vmatpush1.msra.mxu0 %v711
        %743 = vmatprep.subr.mxu0 0.0
        %744 = vmatpush1.msra.mxu0 %v710
        %745 = vmatprep.subr.mxu0 0.0
        %746 = vmatpush1.msra.mxu0 %v709
        %747 = vmatprep.subr.mxu0 0.0
        %748 = vmatpush1.msra.mxu0 %v708
        %749 = vmatprep.subr.mxu0 0.0
        %750 = vmatpush1.msra.mxu0 %v707
        %751 = vmatprep.subr.mxu0 0.0
        %752 = vmatpush2.msra.mxu0 0.0
        %753 = vmatprep.subr.mxu0 0.0
        %754 = vmatpush2.msra.mxu0 0.0
        %755 = vmatprep.subr.mxu0 0.0
        %756 = vmatpush2.msra.mxu0 0.0
        %757 = vmatprep.subr.mxu0 0.0
        %758 = vmatpush2.msra.mxu0 0.0
        %759 = vmatprep.subr.mxu0 0.0
        %760 = vmatpush2.msra.mxu0 0.0
        %761 = vmatprep.subr.mxu0 0.0
        %762 = vmatpush2.msra.mxu0 0.0
        %763 = vmatprep.subr.mxu0 0.0
        %764 = vmatpush2.msra.mxu0 0.0
        %765 = vmatprep.subr.mxu0 0.0
        %766 = vmatpush2.msra.mxu0 0.0
        %767 = vmatprep.subr.mxu0 0.0
        %768 = vmatpush2.msra.mxu0 0.0
        %769 = vmatprep.subr.mxu0 0.0
        %770 = vmatpush2.msra.mxu0 0.0
        %771 = vmatprep.subr.mxu0 0.0
        %772 = vmatpush2.msra.mxu0 0.0
        %773 = vmatprep.subr.mxu0 0.0
        %774 = vmatpush2.msra.mxu0 0.0
        %775 = vmatprep.subr.mxu0 0.0
        %776 = vmatpush2.msra.mxu0 0.0
        %777 = vmatprep.subr.mxu0 0.0
        %778 = vmatpush2.msra.mxu0 0.0
        %779 = vmatprep.subr.mxu0 0.0
        %780 = vmatpush2.msra.mxu0 0.0
        %781 = vmatprep.subr.mxu0 0.0
        %782 = vmatpush2.msra.mxu0 0.0
        %783 = vmatprep.mubr.f32.mxu0 0.0
        %784 = vmatmul.mubr.f32.gmra.mxu0 %v717
        %v785 = vpop.f32.mrf.mxu0
        %v786 = vadd.f32 0.0, %v785
        %v787 = vpop.f32.mrf.mxu0
        %788 = vdwg.mxu0
        %v789 = vld [vmem:[%s16] sm:$0x1]
        %v790 = vlaneseq
        %v791 = vshrl.u32 %v790, 7
        %v792 = vsub.s32 0, %v791
        %v793 = vrot.slane %v789, %v792
        %vm794 = vcmask 64512
        %v796 = vsel %vm794, %v706, 0
        %798 = vmatprep.subr.mxu0 0.0
        %799 = vmatpush1.msra.mxu0 0.0
        %800 = vmatprep.subr.mxu0 0.0
        %801 = vmatpush1.msra.mxu0 0.0
        %802 = vmatprep.subr.mxu0 0.0
        %803 = vmatpush1.msra.mxu0 0.0
        %804 = vmatprep.subr.mxu0 0.0
        %805 = vmatpush1.msra.mxu0 0.0
        %806 = vmatprep.subr.mxu0 0.0
        %807 = vmatpush1.msra.mxu0 0.0
        %808 = vmatprep.subr.mxu0 0.0
        %809 = vmatpush1.msra.mxu0 0.0
        %810 = vmatprep.subr.mxu0 0.0
        %811 = vmatpush1.msra.mxu0 0.0
        %812 = vmatprep.subr.mxu0 0.0
        %813 = vmatpush1.msra.mxu0 0.0
        %814 = vmatprep.subr.mxu0 0.0
        %815 = vmatpush1.msra.mxu0 0.0
        %816 = vmatprep.subr.mxu0 0.0
        %817 = vmatpush1.msra.mxu0 0.0
        %818 = vmatprep.subr.mxu0 0.0
        %819 = vmatpush1.msra.mxu0 0.0
        %820 = vmatprep.subr.mxu0 0.0
        %821 = vmatpush1.msra.mxu0 0.0
        %822 = vmatprep.subr.mxu0 0.0
        %823 = vmatpush1.msra.mxu0 0.0
        %824 = vmatprep.subr.mxu0 0.0
        %825 = vmatpush1.msra.mxu0 0.0
        %826 = vmatprep.subr.mxu0 0.0
        %827 = vmatpush1.msra.mxu0 0.0
        %828 = vmatprep.subr.mxu0 0.0
        %829 = vmatpush1.msra.mxu0 %v786
        %830 = vmatprep.subr.mxu0 0.0
        %831 = vmatpush2.msra.mxu0 0.0
        %832 = vmatprep.subr.mxu0 0.0
        %833 = vmatpush2.msra.mxu0 0.0
        %834 = vmatprep.subr.mxu0 0.0
        %835 = vmatpush2.msra.mxu0 0.0
        %836 = vmatprep.subr.mxu0 0.0
        %837 = vmatpush2.msra.mxu0 0.0
        %838 = vmatprep.subr.mxu0 0.0
        %839 = vmatpush2.msra.mxu0 0.0
        %840 = vmatprep.subr.mxu0 0.0
        %841 = vmatpush2.msra.mxu0 0.0
        %842 = vmatprep.subr.mxu0 0.0
        %843 = vmatpush2.msra.mxu0 0.0
        %844 = vmatprep.subr.mxu0 0.0
        %845 = vmatpush2.msra.mxu0 0.0
        %846 = vmatprep.subr.mxu0 0.0
        %847 = vmatpush2.msra.mxu0 0.0
        %848 = vmatprep.subr.mxu0 0.0
        %849 = vmatpush2.msra.mxu0 0.0
        %850 = vmatprep.subr.mxu0 0.0
        %851 = vmatpush2.msra.mxu0 0.0
        %852 = vmatprep.subr.mxu0 0.0
        %853 = vmatpush2.msra.mxu0 0.0
        %854 = vmatprep.subr.mxu0 0.0
        %855 = vmatpush2.msra.mxu0 0.0
        %856 = vmatprep.subr.mxu0 0.0
        %857 = vmatpush2.msra.mxu0 0.0
        %858 = vmatprep.subr.mxu0 0.0
        %859 = vmatpush2.msra.mxu0 0.0
        %860 = vmatprep.subr.mxu0 0.0
        %861 = vmatpush2.msra.mxu0 0.0
        %862 = vmatprep.mubr.f32.mxu0 0.0
        %863 = vmatmul.mubr.f32.gmra.mxu0 %v796
        %v864 = vpop.f32.mrf.mxu0
        %v865 = vadd.f32 %v793, %v864
        %v866 = vpop.f32.mrf.mxu0
        %867 = vdwg.mxu0
        %v868 = vmax.f32 %v865, 0.0
        %v869 = vld [vmem:[%s8] sm:$0xff]
        %v870 = vld [vmem:[%s8 + $0x8] sm:$0xff]
        %v871 = vld [vmem:[%s8 + $0x10] sm:$0xff]
        %v872 = vld [vmem:[%s8 + $0x18] sm:$0xff]
        %v874 = vsel %vm701, %v868, 0
        %876 = vmatprep.subr.mxu0 0.0
        %877 = vmatpush1.msra.mxu0 0.0
        %878 = vmatprep.subr.mxu0 0.0
        %879 = vmatpush1.msra.mxu0 0.0
        %880 = vmatprep.subr.mxu0 0.0
        %881 = vmatpush1.msra.mxu0 0.0
        %882 = vmatprep.subr.mxu0 0.0
        %883 = vmatpush1.msra.mxu0 0.0
        %884 = vmatprep.subr.mxu0 0.0
        %885 = vmatpush1.msra.mxu0 0.0
        %886 = vmatprep.subr.mxu0 0.0
        %887 = vmatpush1.msra.mxu0 0.0
        %888 = vmatprep.subr.mxu0 0.0
        %889 = vmatpush1.msra.mxu0 0.0
        %890 = vmatprep.subr.mxu0 0.0
        %891 = vmatpush1.msra.mxu0 0.0
        %892 = vmatprep.subr.mxu0 0.0
        %893 = vmatpush1.msra.mxu0 0.0
        %894 = vmatprep.subr.mxu0 0.0
        %895 = vmatpush1.msra.mxu0 0.0
        %896 = vmatprep.subr.mxu0 0.0
        %897 = vmatpush1.msra.mxu0 0.0
        %898 = vmatprep.subr.mxu0 0.0
        %899 = vmatpush1.msra.mxu0 0.0
        %900 = vmatprep.subr.mxu0 0.0
        %901 = vmatpush1.msra.mxu0 %v872
        %902 = vmatprep.subr.mxu0 0.0
        %903 = vmatpush1.msra.mxu0 %v871
        %904 = vmatprep.subr.mxu0 0.0
        %905 = vmatpush1.msra.mxu0 %v870
        %906 = vmatprep.subr.mxu0 0.0
        %907 = vmatpush1.msra.mxu0 %v869
        %908 = vmatprep.subr.mxu0 0.0
        %909 = vmatpush2.msra.mxu0 0.0
        %910 = vmatprep.subr.mxu0 0.0
        %911 = vmatpush2.msra.mxu0 0.0
        %912 = vmatprep.subr.mxu0 0.0
        %913 = vmatpush2.msra.mxu0 0.0
        %914 = vmatprep.subr.mxu0 0.0
        %915 = vmatpush2.msra.mxu0 0.0
        %916 = vmatprep.subr.mxu0 0.0
        %917 = vmatpush2.msra.mxu0 0.0
        %918 = vmatprep.subr.mxu0 0.0
        %919 = vmatpush2.msra.mxu0 0.0
        %920 = vmatprep.subr.mxu0 0.0
        %921 = vmatpush2.msra.mxu0 0.0
        %922 = vmatprep.subr.mxu0 0.0
        %923 = vmatpush2.msra.mxu0 0.0
        %924 = vmatprep.subr.mxu0 0.0
        %925 = vmatpush2.msra.mxu0 0.0
        %926 = vmatprep.subr.mxu0 0.0
        %927 = vmatpush2.msra.mxu0 0.0
        %928 = vmatprep.subr.mxu0 0.0
        %929 = vmatpush2.msra.mxu0 0.0
        %930 = vmatprep.subr.mxu0 0.0
        %931 = vmatpush2.msra.mxu0 0.0
        %932 = vmatprep.subr.mxu0 0.0
        %933 = vmatpush2.msra.mxu0 0.0
        %934 = vmatprep.subr.mxu0 0.0
        %935 = vmatpush2.msra.mxu0 0.0
        %936 = vmatprep.subr.mxu0 0.0
        %937 = vmatpush2.msra.mxu0 0.0
        %938 = vmatprep.subr.mxu0 0.0
        %939 = vmatpush2.msra.mxu0 0.0
        %940 = vmatprep.mubr.f32.mxu0 0.0
        %941 = vmatmul.mubr.f32.gmra.mxu0 %v874
        %v942 = vpop.f32.mrf.mxu0
        %v943 = vadd.f32 0.0, %v942
        %v944 = vpop.f32.mrf.mxu0
        %945 = vdwg.mxu0
        %v946 = vld [vmem:[%s16 + $0x1] sm:$0x1]
        %v947 = vlaneseq
        %v948 = vshrl.u32 %v947, 7
        %v949 = vsub.s32 0, %v948
        %v950 = vrot.slane %v946, %v949
        %951 = vmatprep.subr.mxu0 0.0
        %952 = vmatpush1.msra.mxu0 0.0
        %953 = vmatprep.subr.mxu0 0.0
        %954 = vmatpush1.msra.mxu0 0.0
        %955 = vmatprep.subr.mxu0 0.0
        %956 = vmatpush1.msra.mxu0 0.0
        %957 = vmatprep.subr.mxu0 0.0
        %958 = vmatpush1.msra.mxu0 0.0
        %959 = vmatprep.subr.mxu0 0.0
        %960 = vmatpush1.msra.mxu0 0.0
        %961 = vmatprep.subr.mxu0 0.0
        %962 = vmatpush1.msra.mxu0 0.0
        %963 = vmatprep.subr.mxu0 0.0
        %964 = vmatpush1.msra.mxu0 0.0
        %965 = vmatprep.subr.mxu0 0.0
        %966 = vmatpush1.msra.mxu0 0.0
        %967 = vmatprep.subr.mxu0 0.0
        %968 = vmatpush1.msra.mxu0 0.0
        %969 = vmatprep.subr.mxu0 0.0
        %970 = vmatpush1.msra.mxu0 0.0
        %971 = vmatprep.subr.mxu0 0.0
        %972 = vmatpush1.msra.mxu0 0.0
        %973 = vmatprep.subr.mxu0 0.0
        %974 = vmatpush1.msra.mxu0 0.0
        %975 = vmatprep.subr.mxu0 0.0
        %976 = vmatpush1.msra.mxu0 0.0
        %977 = vmatprep.subr.mxu0 0.0
        %978 = vmatpush1.msra.mxu0 0.0
        %979 = vmatprep.subr.mxu0 0.0
        %980 = vmatpush1.msra.mxu0 0.0
        %981 = vmatprep.subr.mxu0 0.0
        %982 = vmatpush1.msra.mxu0 %v943
        %983 = vmatprep.subr.mxu0 0.0
        %984 = vmatpush2.msra.mxu0 0.0
        %985 = vmatprep.subr.mxu0 0.0
        %986 = vmatpush2.msra.mxu0 0.0
        %987 = vmatprep.subr.mxu0 0.0
        %988 = vmatpush2.msra.mxu0 0.0
        %989 = vmatprep.subr.mxu0 0.0
        %990 = vmatpush2.msra.mxu0 0.0
        %991 = vmatprep.subr.mxu0 0.0
        %992 = vmatpush2.msra.mxu0 0.0
        %993 = vmatprep.subr.mxu0 0.0
        %994 = vmatpush2.msra.mxu0 0.0
        %995 = vmatprep.subr.mxu0 0.0
        %996 = vmatpush2.msra.mxu0 0.0
        %997 = vmatprep.subr.mxu0 0.0
        %998 = vmatpush2.msra.mxu0 0.0
        %999 = vmatprep.subr.mxu0 0.0
        %1000 = vmatpush2.msra.mxu0 0.0
        %1001 = vmatprep.subr.mxu0 0.0
        %1002 = vmatpush2.msra.mxu0 0.0
        %1003 = vmatprep.subr.mxu0 0.0
        %1004 = vmatpush2.msra.mxu0 0.0
        %1005 = vmatprep.subr.mxu0 0.0
        %1006 = vmatpush2.msra.mxu0 0.0
        %1007 = vmatprep.subr.mxu0 0.0
        %1008 = vmatpush2.msra.mxu0 0.0
        %1009 = vmatprep.subr.mxu0 0.0
        %1010 = vmatpush2.msra.mxu0 0.0
        %1011 = vmatprep.subr.mxu0 0.0
        %1012 = vmatpush2.msra.mxu0 0.0
        %1013 = vmatprep.subr.mxu0 0.0
        %1014 = vmatpush2.msra.mxu0 0.0
        %1015 = vmatprep.mubr.f32.mxu0 0.0
        %1016 = vmatmul.mubr.f32.gmra.mxu0 %v796
        %v1017 = vpop.f32.mrf.mxu0
        %v1018 = vadd.f32 %v950, %v1017
        %v1019 = vpop.f32.mrf.mxu0
        %1020 = vdwg.mxu0
        %v1021 = vld [vmem:[%s16 + $0x2] sm:$0x1]
        %v1022 = vld [vmem:[%s16 + $0x3] sm:$0x1]
        %v1023 = vsel %vm715, %v1018, 0.0
        %1024 = vadd.xlane.f32.xlu0 %v1023
        %v1025 = vpop.xlane.xlu0 %1024
        %v1026 = vrcp.pop 64.0
        %v1027 = vmul.f32 %v1025, %v1026
        %v1028 = vsub.f32 %v1018, %v1027
        %v1029 = vmul.f32 %v1028, %v1028
        %v1030 = vsel %vm715, %v1029, 0.0
        %1031 = vadd.xlane.f32.xlu0 %v1030
        %v1032 = vpop.xlane.xlu0 %1031
        %v1033 = vrsqrt.pop %v1032
        %v1034 = vmul.f32 %v1032, %v1033
        %vm1035 = vcmp.eq.f32.partialorder %v1032, inf
        %v1036 = vsel %vm1035, %v1032, %v1034
        %vm1037 = vcmp.eq.f32.partialorder %v1032, 0.0
        %v1038 = vand.u32 %v1032, 2147483648
        %v1039 = vsel %vm1037, %v1038, %v1036
        %v1040 = vlaneseq
        %v1041 = vshrl.u32 %v1040, 7
        %v1042 = vsub.s32 0, %v1041
        %v1043 = vrot.slane %v1021, %v1042
        %v1044 = vmul.f32 %v1043, %v1028
        %v1045 = vadd.f32 %v1039, 1e-06
        %v1046 = vrcp.pop %v1045
        %v1047 = vmul.f32 %v1044, %v1046
        %v1048 = vlaneseq
        %v1049 = vshrl.u32 %v1048, 7
        %v1050 = vsub.s32 0, %v1049
        %v1051 = vrot.slane %v1022, %v1050
        %v1052 = vadd.f32 %v1047, %v1051
        %v1053 = vadd.f32 %v1052, %v702
        %v1054 = vld [vmem:[%s676] sm:$0xff]
        %vm1055 = vcmp.ne.f32.partialorder %v1054, 0.0
        %v1056 = vsel %vm1055, 1, 0
        %1057 = vset.pattern.permute.xlu0 0
        %1058 = vperm.xlu0 %1057, %v1056
        %v1059 = vpop.permute.xlu0 %1058
        %vm1060 = vcmp.eq.s32.totalorder %v1059, 1
        %v1061 = vsel %vm1060, 0.0, %v682
        %vm1062 = vcmask 31744
        %v1063 = vsel %vm1062, %v1061, 0.0
        %v1064 = vrot.slane %v1063, 4
        %v1065 = vadd.f32 %v1063, %v1064
        %v1066 = vrot.slane %v1065, 2
        %v1067 = vadd.f32 %v1065, %v1066
        %v1068 = vrot.slane %v1067, 1
        %v1069 = vadd.f32 %v1067, %v1068
        %v1070 = vadd.f32 %v1069, 1e-30
        %v1071 = vrcp.pop %v1070
        %v1072 = vmul.f32 %v1061, %v1071
        %1074 = vset.pattern.permute.xlu0 0
        %1075 = vperm.xlu0 %1074, %v1072
        %v1076 = vpop.permute.xlu0 %1075
        %v1078 = vmul.f32 %v1076, %v1053
        %v1079 = vsel %vm715, %v1078, 0.0
        %v1080 = vrot.slane %v1079, 4
        %v1081 = vadd.f32 %v1079, %v1080
        %v1082 = vrot.slane %v1081, 2
        %v1083 = vadd.f32 %v1081, %v1082
        %v1084 = vrot.slane %v1083, 1
        %v1085 = vadd.f32 %v1083, %v1084
        %1086 = vset.pattern.permute.xlu0 1
        %1087 = vperm.xlu0 %1086, %v1072
        %v1088 = vpop.permute.xlu0 %1087
        %v1090 = vmul.f32 %v1088, %v1053
        %v1091 = vsel %vm715, %v1090, 0.0
        %v1092 = vrot.slane %v1091, 4
        %v1093 = vadd.f32 %v1091, %v1092
        %v1094 = vrot.slane %v1093, 2
        %v1095 = vadd.f32 %v1093, %v1094
        %v1096 = vrot.slane %v1095, 1
        %v1097 = vadd.f32 %v1095, %v1096
        %1098 = vset.pattern.permute.xlu0 2
        %1099 = vperm.xlu0 %1098, %v1072
        %v1100 = vpop.permute.xlu0 %1099
        %v1102 = vmul.f32 %v1100, %v1053
        %v1103 = vsel %vm715, %v1102, 0.0
        %v1104 = vrot.slane %v1103, 4
        %v1105 = vadd.f32 %v1103, %v1104
        %v1106 = vrot.slane %v1105, 2
        %v1107 = vadd.f32 %v1105, %v1106
        %v1108 = vrot.slane %v1107, 1
        %v1109 = vadd.f32 %v1107, %v1108
        %1110 = vset.pattern.permute.xlu0 3
        %1111 = vperm.xlu0 %1110, %v1072
        %v1112 = vpop.permute.xlu0 %1111
        %v1114 = vmul.f32 %v1112, %v1053
        %v1115 = vsel %vm715, %v1114, 0.0
        %v1116 = vrot.slane %v1115, 4
        %v1117 = vadd.f32 %v1115, %v1116
        %v1118 = vrot.slane %v1117, 2
        %v1119 = vadd.f32 %v1117, %v1118
        %v1120 = vrot.slane %v1119, 1
        %v1121 = vadd.f32 %v1119, %v1120
        %vm1122 = vcmask 1040384
        %v1123 = vsel %vm1122, %v1085, %v1097
        %vm1124 = vcmask 1041408
        %v1125 = vsel %vm1124, %v1123, %v1109
        %vm1126 = vcmask 1042432
        %v1127 = vsel %vm1126, %v1125, %v1121
        %v1128 = vld [vmem:[%s9] sm:$0xff]
        %v1129 = vld [vmem:[%s9 + $0x8] sm:$0xff]
        %v1130 = vld [vmem:[%s9 + $0x10] sm:$0xff]
        %v1131 = vld [vmem:[%s9 + $0x18] sm:$0xff]
        %v1132 = vld [vmem:[%s9 + $0x20] sm:$0xff]
        %v1133 = vld [vmem:[%s9 + $0x28] sm:$0xff]
        %v1134 = vld [vmem:[%s9 + $0x30] sm:$0xff]
        %v1135 = vld [vmem:[%s9 + $0x38] sm:$0xff]
        %v1136 = vld [vmem:[%s16 + $0x4] sm:$0x1]
        %v1137 = vlaneseq
        %v1138 = vshrl.u32 %v1137, 7
        %v1139 = vsub.s32 0, %v1138
        %v1140 = vrot.slane %v1136, %v1139
        %v1142 = vsel %vm715, %v1127, 0
        %1144 = vmatprep.subr.mxu0 0.0
        %1145 = vmatpush1.msra.mxu0 0.0
        %1146 = vmatprep.subr.mxu0 0.0
        %1147 = vmatpush1.msra.mxu0 0.0
        %1148 = vmatprep.subr.mxu0 0.0
        %1149 = vmatpush1.msra.mxu0 0.0
        %1150 = vmatprep.subr.mxu0 0.0
        %1151 = vmatpush1.msra.mxu0 0.0
        %1152 = vmatprep.subr.mxu0 0.0
        %1153 = vmatpush1.msra.mxu0 0.0
        %1154 = vmatprep.subr.mxu0 0.0
        %1155 = vmatpush1.msra.mxu0 0.0
        %1156 = vmatprep.subr.mxu0 0.0
        %1157 = vmatpush1.msra.mxu0 0.0
        %1158 = vmatprep.subr.mxu0 0.0
        %1159 = vmatpush1.msra.mxu0 0.0
        %1160 = vmatprep.subr.mxu0 0.0
        %1161 = vmatpush1.msra.mxu0 %v1135
        %1162 = vmatprep.subr.mxu0 0.0
        %1163 = vmatpush1.msra.mxu0 %v1134
        %1164 = vmatprep.subr.mxu0 0.0
        %1165 = vmatpush1.msra.mxu0 %v1133
        %1166 = vmatprep.subr.mxu0 0.0
        %1167 = vmatpush1.msra.mxu0 %v1132
        %1168 = vmatprep.subr.mxu0 0.0
        %1169 = vmatpush1.msra.mxu0 %v1131
        %1170 = vmatprep.subr.mxu0 0.0
        %1171 = vmatpush1.msra.mxu0 %v1130
        %1172 = vmatprep.subr.mxu0 0.0
        %1173 = vmatpush1.msra.mxu0 %v1129
        %1174 = vmatprep.subr.mxu0 0.0
        %1175 = vmatpush1.msra.mxu0 %v1128
        %1176 = vmatprep.subr.mxu0 0.0
        %1177 = vmatpush2.msra.mxu0 0.0
        %1178 = vmatprep.subr.mxu0 0.0
        %1179 = vmatpush2.msra.mxu0 0.0
        %1180 = vmatprep.subr.mxu0 0.0
        %1181 = vmatpush2.msra.mxu0 0.0
        %1182 = vmatprep.subr.mxu0 0.0
        %1183 = vmatpush2.msra.mxu0 0.0
        %1184 = vmatprep.subr.mxu0 0.0
        %1185 = vmatpush2.msra.mxu0 0.0
        %1186 = vmatprep.subr.mxu0 0.0
        %1187 = vmatpush2.msra.mxu0 0.0
        %1188 = vmatprep.subr.mxu0 0.0
        %1189 = vmatpush2.msra.mxu0 0.0
        %1190 = vmatprep.subr.mxu0 0.0
        %1191 = vmatpush2.msra.mxu0 0.0
        %1192 = vmatprep.subr.mxu0 0.0
        %1193 = vmatpush2.msra.mxu0 0.0
        %1194 = vmatprep.subr.mxu0 0.0
        %1195 = vmatpush2.msra.mxu0 0.0
        %1196 = vmatprep.subr.mxu0 0.0
        %1197 = vmatpush2.msra.mxu0 0.0
        %1198 = vmatprep.subr.mxu0 0.0
        %1199 = vmatpush2.msra.mxu0 0.0
        %1200 = vmatprep.subr.mxu0 0.0
        %1201 = vmatpush2.msra.mxu0 0.0
        %1202 = vmatprep.subr.mxu0 0.0
        %1203 = vmatpush2.msra.mxu0 0.0
        %1204 = vmatprep.subr.mxu0 0.0
        %1205 = vmatpush2.msra.mxu0 0.0
        %1206 = vmatprep.subr.mxu0 0.0
        %1207 = vmatpush2.msra.mxu0 0.0
        %1208 = vmatprep.mubr.f32.mxu0 0.0
        %1209 = vmatmul.mubr.f32.gmra.mxu0 %v1142
        %v1210 = vpop.f32.mrf.mxu0
        %v1211 = vadd.f32 %v1140, %v1210
        %v1212 = vpop.f32.mrf.mxu0
        %1213 = vdwg.mxu0
        %v1214 = vmax.f32 %v1211, 0.0
        %v1215 = vld [vmem:[%s16 + $0x5] sm:$0x1]
        %v1216 = vld [vmem:[%s16 + $0x6] sm:$0x1]
        %vm1217 = vcmask 257024
        %v1218 = vsel %vm1217, %v1214, 0.0
        %1219 = vadd.xlane.f32.xlu0 %v1218
        %v1220 = vpop.xlane.xlu0 %1219
        %v1221 = vrcp.pop 32.0
        %v1222 = vmul.f32 %v1220, %v1221
        %v1223 = vsub.f32 %v1214, %v1222
        %v1224 = vmul.f32 %v1223, %v1223
        %v1225 = vsel %vm1217, %v1224, 0.0
        %1226 = vadd.xlane.f32.xlu0 %v1225
        %v1227 = vpop.xlane.xlu0 %1226
        %v1228 = vrsqrt.pop %v1227
        %v1229 = vmul.f32 %v1227, %v1228
        %vm1230 = vcmp.eq.f32.partialorder %v1227, inf
        %v1231 = vsel %vm1230, %v1227, %v1229
        %vm1232 = vcmp.eq.f32.partialorder %v1227, 0.0
        %v1233 = vand.u32 %v1227, 2147483648
        %v1234 = vsel %vm1232, %v1233, %v1231
        %v1235 = vlaneseq
        %v1236 = vshrl.u32 %v1235, 7
        %v1237 = vsub.s32 0, %v1236
        %v1238 = vrot.slane %v1215, %v1237
        %v1239 = vmul.f32 %v1238, %v1223
        %v1240 = vadd.f32 %v1234, 1e-06
        %v1241 = vrcp.pop %v1240
        %v1242 = vmul.f32 %v1239, %v1241
        %v1243 = vlaneseq
        %v1244 = vshrl.u32 %v1243, 7
        %v1245 = vsub.s32 0, %v1244
        %v1246 = vrot.slane %v1216, %v1245
        %v1247 = vadd.f32 %v1242, %v1246
        %v1248 = vld [vmem:[%s10] sm:$0xff]
        %v1249 = vld [vmem:[%s10 + $0x8] sm:$0xff]
        %v1250 = vld [vmem:[%s10 + $0x10] sm:$0xff]
        %v1251 = vld [vmem:[%s10 + $0x18] sm:$0xff]
        %v1252 = vld [vmem:[%s12] sm:$0xf]
        %v1254 = vsel %vm701, %v1247, 0
        %1256 = vmatprep.subr.mxu0 0.0
        %1257 = vmatpush1.msra.mxu0 0.0
        %1258 = vmatprep.subr.mxu0 0.0
        %1259 = vmatpush1.msra.mxu0 0.0
        %1260 = vmatprep.subr.mxu0 0.0
        %1261 = vmatpush1.msra.mxu0 0.0
        %1262 = vmatprep.subr.mxu0 0.0
        %1263 = vmatpush1.msra.mxu0 0.0
        %1264 = vmatprep.subr.mxu0 0.0
        %1265 = vmatpush1.msra.mxu0 0.0
        %1266 = vmatprep.subr.mxu0 0.0
        %1267 = vmatpush1.msra.mxu0 0.0
        %1268 = vmatprep.subr.mxu0 0.0
        %1269 = vmatpush1.msra.mxu0 0.0
        %1270 = vmatprep.subr.mxu0 0.0
        %1271 = vmatpush1.msra.mxu0 0.0
        %1272 = vmatprep.subr.mxu0 0.0
        %1273 = vmatpush1.msra.mxu0 0.0
        %1274 = vmatprep.subr.mxu0 0.0
        %1275 = vmatpush1.msra.mxu0 0.0
        %1276 = vmatprep.subr.mxu0 0.0
        %1277 = vmatpush1.msra.mxu0 0.0
        %1278 = vmatprep.subr.mxu0 0.0
        %1279 = vmatpush1.msra.mxu0 0.0
        %1280 = vmatprep.subr.mxu0 0.0
        %1281 = vmatpush1.msra.mxu0 %v1251
        %1282 = vmatprep.subr.mxu0 0.0
        %1283 = vmatpush1.msra.mxu0 %v1250
        %1284 = vmatprep.subr.mxu0 0.0
        %1285 = vmatpush1.msra.mxu0 %v1249
        %1286 = vmatprep.subr.mxu0 0.0
        %1287 = vmatpush1.msra.mxu0 %v1248
        %1288 = vmatprep.subr.mxu0 0.0
        %1289 = vmatpush2.msra.mxu0 0.0
        %1290 = vmatprep.subr.mxu0 0.0
        %1291 = vmatpush2.msra.mxu0 0.0
        %1292 = vmatprep.subr.mxu0 0.0
        %1293 = vmatpush2.msra.mxu0 0.0
        %1294 = vmatprep.subr.mxu0 0.0
        %1295 = vmatpush2.msra.mxu0 0.0
        %1296 = vmatprep.subr.mxu0 0.0
        %1297 = vmatpush2.msra.mxu0 0.0
        %1298 = vmatprep.subr.mxu0 0.0
        %1299 = vmatpush2.msra.mxu0 0.0
        %1300 = vmatprep.subr.mxu0 0.0
        %1301 = vmatpush2.msra.mxu0 0.0
        %1302 = vmatprep.subr.mxu0 0.0
        %1303 = vmatpush2.msra.mxu0 0.0
        %1304 = vmatprep.subr.mxu0 0.0
        %1305 = vmatpush2.msra.mxu0 0.0
        %1306 = vmatprep.subr.mxu0 0.0
        %1307 = vmatpush2.msra.mxu0 0.0
        %1308 = vmatprep.subr.mxu0 0.0
        %1309 = vmatpush2.msra.mxu0 0.0
        %1310 = vmatprep.subr.mxu0 0.0
        %1311 = vmatpush2.msra.mxu0 0.0
        %1312 = vmatprep.subr.mxu0 0.0
        %1313 = vmatpush2.msra.mxu0 0.0
        %1314 = vmatprep.subr.mxu0 0.0
        %1315 = vmatpush2.msra.mxu0 0.0
        %1316 = vmatprep.subr.mxu0 0.0
        %1317 = vmatpush2.msra.mxu0 0.0
        %1318 = vmatprep.subr.mxu0 0.0
        %1319 = vmatpush2.msra.mxu0 0.0
        %1320 = vmatprep.mubr.f32.mxu0 0.0
        %1321 = vmatmul.mubr.f32.gmra.mxu0 %v1254
        %v1322 = vpop.f32.mrf.mxu0
        %v1323 = vadd.f32 %v1252, %v1322
        %v1324 = vpop.f32.mrf.mxu0
        %1325 = vdwg.mxu0
        %v1326 = vld [vmem:[%s16 + $0x7] sm:$0x1]
        %v1327 = vlaneseq
        %v1328 = vshrl.u32 %v1327, 7
        %v1329 = vsub.s32 0, %v1328
        %v1330 = vrot.slane %v1326, %v1329
        %v1331 = vadd.f32 %v1323, %v1330
        %v1332 = vmax.f32 %v1331, 0.0
        %v1333 = vld [vmem:[%s16 + $0x8] sm:$0x1]
        %v1334 = vld [vmem:[%s16 + $0x9] sm:$0x1]
        %vm1335 = vcmask 519168
        %v1336 = vsel %vm1335, %v1332, 0.0
        %1337 = vadd.xlane.f32.xlu0 %v1336
        %v1338 = vpop.xlane.xlu0 %1337
        %v1339 = vmul.f32 %v1338, %v1026
        %v1340 = vsub.f32 %v1332, %v1339
        %v1341 = vmul.f32 %v1340, %v1340
        %v1342 = vsel %vm1335, %v1341, 0.0
        %1343 = vadd.xlane.f32.xlu0 %v1342
        %v1344 = vpop.xlane.xlu0 %1343
        %v1345 = vrsqrt.pop %v1344
        %v1346 = vmul.f32 %v1344, %v1345
        %vm1347 = vcmp.eq.f32.partialorder %v1344, inf
        %v1348 = vsel %vm1347, %v1344, %v1346
        %vm1349 = vcmp.eq.f32.partialorder %v1344, 0.0
        %v1350 = vand.u32 %v1344, 2147483648
        %v1351 = vsel %vm1349, %v1350, %v1348
        %v1352 = vlaneseq
        %v1353 = vshrl.u32 %v1352, 7
        %v1354 = vsub.s32 0, %v1353
        %v1355 = vrot.slane %v1333, %v1354
        %v1356 = vmul.f32 %v1355, %v1340
        %v1357 = vadd.f32 %v1351, 1e-06
        %v1358 = vrcp.pop %v1357
        %v1359 = vmul.f32 %v1356, %v1358
        %v1360 = vlaneseq
        %v1361 = vshrl.u32 %v1360, 7
        %v1362 = vsub.s32 0, %v1361
        %v1363 = vrot.slane %v1334, %v1362
        %v1364 = vadd.f32 %v1359, %v1363
        %v1365 = vld [vmem:[%s11] sm:$0xf]
        %v1366 = vadd.f32 %v1364, %v1365
        %v1367 = vmul.f32 %v1053, %v1053
        %v1368 = vsel %vm715, %v1367, 0.0
        %1369 = vadd.xlane.f32.xlu0 %v1368
        %v1370 = vpop.xlane.xlu0 %1369
        %v1371 = vadd.f32 %v1370, 1e-12
        %v1372 = vrsqrt.pop %v1371
        %v1373 = vmul.f32 %v1053, %v1372
        %v1374 = vmul.f32 %v1366, %v1366
        %v1375 = vsel %vm1335, %v1374, 0.0
        %1376 = vadd.xlane.f32.xlu0 %v1375
        %v1377 = vpop.xlane.xlu0 %1376
        %v1378 = vadd.f32 %v1377, 1e-12
        %v1379 = vrsqrt.pop %v1378
        %v1380 = vmul.f32 %v1366, %v1379
        %v1382 = vrot.slane %v1380, 1
        %1383 = vrot.lane.b32.xlu0 %v1382, 64
        %v1384 = vpop.permute.xlu0 %1383
        %v1386 = vrot.slane %v1380, 2
        %v1388 = vrot.slane %v1380, 3
        %1389 = vrot.lane.b32.xlu0 %v1388, 64
        %v1390 = vpop.permute.xlu0 %1389
        %v1392 = vsel %vm715, %v1380, %v1384
        %v1393 = vsel %vm715, %v1386, %v1390
        %v1395 = vrot.slane %v1366, 1
        %1396 = vrot.lane.b32.xlu0 %v1395, 64
        %v1397 = vpop.permute.xlu0 %1396
        %v1399 = vrot.slane %v1366, 2
        %v1401 = vrot.slane %v1366, 3
        %1402 = vrot.lane.b32.xlu0 %v1401, 64
        %v1403 = vpop.permute.xlu0 %1402
        %v1405 = vsel %vm715, %v1366, %v1397
        %v1406 = vsel %vm715, %v1399, %v1403
        %v1407 = vld [vmem:[%s13] sm:$0xff]
        %v1408 = vld [vmem:[%s13 + $0x8] sm:$0xff]
        %v1409 = vld [vmem:[%s13 + $0x10] sm:$0xff]
        %v1410 = vld [vmem:[%s13 + $0x18] sm:$0xff]
        %v1411 = vld [vmem:[%s13 + $0x20] sm:$0xff]
        %v1412 = vld [vmem:[%s13 + $0x28] sm:$0xff]
        %v1413 = vld [vmem:[%s13 + $0x30] sm:$0xff]
        %v1414 = vld [vmem:[%s13 + $0x38] sm:$0xff]
        %v1416 = vsel %vm715, %v1373, 0
        %1418 = vmatprep.subr.mxu0 0.0
        %1419 = vmatpush1.msra.mxu0 0.0
        %1420 = vmatprep.subr.mxu0 0.0
        %1421 = vmatpush1.msra.mxu0 0.0
        %1422 = vmatprep.subr.mxu0 0.0
        %1423 = vmatpush1.msra.mxu0 0.0
        %1424 = vmatprep.subr.mxu0 0.0
        %1425 = vmatpush1.msra.mxu0 0.0
        %1426 = vmatprep.subr.mxu0 0.0
        %1427 = vmatpush1.msra.mxu0 0.0
        %1428 = vmatprep.subr.mxu0 0.0
        %1429 = vmatpush1.msra.mxu0 0.0
        %1430 = vmatprep.subr.mxu0 0.0
        %1431 = vmatpush1.msra.mxu0 0.0
        %1432 = vmatprep.subr.mxu0 0.0
        %1433 = vmatpush1.msra.mxu0 0.0
        %1434 = vmatprep.subr.mxu0 0.0
        %1435 = vmatpush1.msra.mxu0 %v1414
        %1436 = vmatprep.subr.mxu0 0.0
        %1437 = vmatpush1.msra.mxu0 %v1413
        %1438 = vmatprep.subr.mxu0 0.0
        %1439 = vmatpush1.msra.mxu0 %v1412
        %1440 = vmatprep.subr.mxu0 0.0
        %1441 = vmatpush1.msra.mxu0 %v1411
        %1442 = vmatprep.subr.mxu0 0.0
        %1443 = vmatpush1.msra.mxu0 %v1410
        %1444 = vmatprep.subr.mxu0 0.0
        %1445 = vmatpush1.msra.mxu0 %v1409
        %1446 = vmatprep.subr.mxu0 0.0
        %1447 = vmatpush1.msra.mxu0 %v1408
        %1448 = vmatprep.subr.mxu0 0.0
        %1449 = vmatpush1.msra.mxu0 %v1407
        %1450 = vmatprep.subr.mxu0 0.0
        %1451 = vmatpush2.msra.mxu0 0.0
        %1452 = vmatprep.subr.mxu0 0.0
        %1453 = vmatpush2.msra.mxu0 0.0
        %1454 = vmatprep.subr.mxu0 0.0
        %1455 = vmatpush2.msra.mxu0 0.0
        %1456 = vmatprep.subr.mxu0 0.0
        %1457 = vmatpush2.msra.mxu0 0.0
        %1458 = vmatprep.subr.mxu0 0.0
        %1459 = vmatpush2.msra.mxu0 0.0
        %1460 = vmatprep.subr.mxu0 0.0
        %1461 = vmatpush2.msra.mxu0 0.0
        %1462 = vmatprep.subr.mxu0 0.0
        %1463 = vmatpush2.msra.mxu0 0.0
        %1464 = vmatprep.subr.mxu0 0.0
        %1465 = vmatpush2.msra.mxu0 0.0
        %1466 = vmatprep.subr.mxu0 0.0
        %1467 = vmatpush2.msra.mxu0 0.0
        %1468 = vmatprep.subr.mxu0 0.0
        %1469 = vmatpush2.msra.mxu0 0.0
        %1470 = vmatprep.subr.mxu0 0.0
        %1471 = vmatpush2.msra.mxu0 0.0
        %1472 = vmatprep.subr.mxu0 0.0
        %1473 = vmatpush2.msra.mxu0 0.0
        %1474 = vmatprep.subr.mxu0 0.0
        %1475 = vmatpush2.msra.mxu0 0.0
        %1476 = vmatprep.subr.mxu0 0.0
        %1477 = vmatpush2.msra.mxu0 0.0
        %1478 = vmatprep.subr.mxu0 0.0
        %1479 = vmatpush2.msra.mxu0 0.0
        %1480 = vmatprep.subr.mxu0 0.0
        %1481 = vmatpush2.msra.mxu0 0.0
        %1482 = vmatprep.mubr.f32.mxu0 0.0
        %1483 = vmatmul.mubr.f32.gmra.mxu0 %v1416
        %v1484 = vpop.f32.mrf.mxu0
        %v1485 = vadd.f32 0.0, %v1484
        %v1486 = vpop.f32.mrf.mxu0
        %1487 = vdwg.mxu0
        %v1488 = vld [vmem:[%s14] sm:$0xff]
        %v1489 = vld [vmem:[%s14 + $0x8] sm:$0xff]
        %v1490 = vld [vmem:[%s14 + $0x10] sm:$0xff]
        %v1491 = vld [vmem:[%s14 + $0x18] sm:$0xff]
        %v1492 = vld [vmem:[%s14 + $0x20] sm:$0xff]
        %v1493 = vld [vmem:[%s14 + $0x28] sm:$0xff]
        %v1494 = vld [vmem:[%s14 + $0x30] sm:$0xff]
        %v1495 = vld [vmem:[%s14 + $0x38] sm:$0xff]
        %v1496 = vld [vmem:[%s14 + $0x40] sm:$0xff]
        %v1497 = vld [vmem:[%s14 + $0x48] sm:$0xff]
        %v1498 = vld [vmem:[%s14 + $0x50] sm:$0xff]
        %v1499 = vld [vmem:[%s14 + $0x58] sm:$0xff]
        %v1500 = vld [vmem:[%s14 + $0x60] sm:$0xff]
        %v1501 = vld [vmem:[%s14 + $0x68] sm:$0xff]
        %v1502 = vld [vmem:[%s14 + $0x70] sm:$0xff]
        %v1503 = vld [vmem:[%s14 + $0x78] sm:$0xff]
        %v1504 = vld [vmem:[%s14 + $0x80] sm:$0xff]
        %v1505 = vld [vmem:[%s14 + $0x88] sm:$0xff]
        %v1506 = vld [vmem:[%s14 + $0x90] sm:$0xff]
        %v1507 = vld [vmem:[%s14 + $0x98] sm:$0xff]
        %v1508 = vld [vmem:[%s14 + $0xa0] sm:$0xff]
        %v1509 = vld [vmem:[%s14 + $0xa8] sm:$0xff]
        %v1510 = vld [vmem:[%s14 + $0xb0] sm:$0xff]
        %v1511 = vld [vmem:[%s14 + $0xb8] sm:$0xff]
        %v1512 = vld [vmem:[%s14 + $0xc0] sm:$0xff]
        %v1513 = vld [vmem:[%s14 + $0xc8] sm:$0xff]
        %v1514 = vld [vmem:[%s14 + $0xd0] sm:$0xff]
        %v1515 = vld [vmem:[%s14 + $0xd8] sm:$0xff]
        %v1516 = vld [vmem:[%s14 + $0xe0] sm:$0xff]
        %v1517 = vld [vmem:[%s14 + $0xe8] sm:$0xff]
        %v1518 = vld [vmem:[%s14 + $0xf0] sm:$0xff]
        %v1519 = vld [vmem:[%s14 + $0xf8] sm:$0xff]
        %1520 = vmatprep.subr.mxu0 0.0
        %1521 = vmatpush1.msra.mxu0 %v1503
        %1522 = vmatprep.subr.mxu0 0.0
        %1523 = vmatpush1.msra.mxu0 %v1502
        %1524 = vmatprep.subr.mxu0 0.0
        %1525 = vmatpush1.msra.mxu0 %v1501
        %1526 = vmatprep.subr.mxu0 0.0
        %1527 = vmatpush1.msra.mxu0 %v1500
        %1528 = vmatprep.subr.mxu0 0.0
        %1529 = vmatpush1.msra.mxu0 %v1499
        %1530 = vmatprep.subr.mxu0 0.0
        %1531 = vmatpush1.msra.mxu0 %v1498
        %1532 = vmatprep.subr.mxu0 0.0
        %1533 = vmatpush1.msra.mxu0 %v1497
        %1534 = vmatprep.subr.mxu0 0.0
        %1535 = vmatpush1.msra.mxu0 %v1496
        %1536 = vmatprep.subr.mxu0 0.0
        %1537 = vmatpush1.msra.mxu0 %v1495
        %1538 = vmatprep.subr.mxu0 0.0
        %1539 = vmatpush1.msra.mxu0 %v1494
        %1540 = vmatprep.subr.mxu0 0.0
        %1541 = vmatpush1.msra.mxu0 %v1493
        %1542 = vmatprep.subr.mxu0 0.0
        %1543 = vmatpush1.msra.mxu0 %v1492
        %1544 = vmatprep.subr.mxu0 0.0
        %1545 = vmatpush1.msra.mxu0 %v1491
        %1546 = vmatprep.subr.mxu0 0.0
        %1547 = vmatpush1.msra.mxu0 %v1490
        %1548 = vmatprep.subr.mxu0 0.0
        %1549 = vmatpush1.msra.mxu0 %v1489
        %1550 = vmatprep.subr.mxu0 0.0
        %1551 = vmatpush1.msra.mxu0 %v1488
        %1552 = vmatprep.subr.mxu0 0.0
        %1553 = vmatpush2.msra.mxu0 %v1519
        %1554 = vmatprep.subr.mxu0 0.0
        %1555 = vmatpush2.msra.mxu0 %v1518
        %1556 = vmatprep.subr.mxu0 0.0
        %1557 = vmatpush2.msra.mxu0 %v1517
        %1558 = vmatprep.subr.mxu0 0.0
        %1559 = vmatpush2.msra.mxu0 %v1516
        %1560 = vmatprep.subr.mxu0 0.0
        %1561 = vmatpush2.msra.mxu0 %v1515
        %1562 = vmatprep.subr.mxu0 0.0
        %1563 = vmatpush2.msra.mxu0 %v1514
        %1564 = vmatprep.subr.mxu0 0.0
        %1565 = vmatpush2.msra.mxu0 %v1513
        %1566 = vmatprep.subr.mxu0 0.0
        %1567 = vmatpush2.msra.mxu0 %v1512
        %1568 = vmatprep.subr.mxu0 0.0
        %1569 = vmatpush2.msra.mxu0 %v1511
        %1570 = vmatprep.subr.mxu0 0.0
        %1571 = vmatpush2.msra.mxu0 %v1510
        %1572 = vmatprep.subr.mxu0 0.0
        %1573 = vmatpush2.msra.mxu0 %v1509
        %1574 = vmatprep.subr.mxu0 0.0
        %1575 = vmatpush2.msra.mxu0 %v1508
        %1576 = vmatprep.subr.mxu0 0.0
        %1577 = vmatpush2.msra.mxu0 %v1507
        %1578 = vmatprep.subr.mxu0 0.0
        %1579 = vmatpush2.msra.mxu0 %v1506
        %1580 = vmatprep.subr.mxu0 0.0
        %1581 = vmatpush2.msra.mxu0 %v1505
        %1582 = vmatprep.subr.mxu0 0.0
        %1583 = vmatpush2.msra.mxu0 %v1504
        %1584 = vmatprep.mubr.f32.mxu0 %v1393
        %1585 = vmatmul.mubr.f32.gmra.mxu0 %v1392
        %v1586 = vpop.f32.mrf.mxu0
        %v1587 = vadd.f32 0.0, %v1586
        %v1588 = vpop.f32.mrf.mxu0
        %1589 = vdwg.mxu0
        %v1590 = vlaneseq
        %v1591 = vshrl.u32 %v1590, 7
        %v1592 = vsub.s32 0, %v1591
        %v1593 = vrot.slane %v1587, %v1592
        %v1594 = vadd.f32 %v1485, %v1593
        %v1595 = vld [vmem:[%s16 + $0xa] sm:$0x1]
        %v1596 = vlaneseq
        %v1597 = vshrl.u32 %v1596, 7
        %v1598 = vsub.s32 0, %v1597
        %v1599 = vrot.slane %v1595, %v1598
        %v1600 = vadd.f32 %v1594, %v1599
        %v1601 = vld [vmem:[%s16 + $0xc] sm:$0x1]
        %v1602 = vxor.u32 %v1600, 2147483648
        %v1603 = vmul.f32 %v1602, 1.442695
        %v1604 = vpow.pop %v1603
        %v1605 = vadd.f32 %v1604, 1.0
        %v1606 = vrcp.pop %v1605
        %v1607 = vmul.f32 1.0, %v1606
        %s1609 = vtos %v1601
        %v1610 = vstv %s1609
        %v1612 = vmax.f32 %v1607, %v1610
        %v1613 = vsel %vm1062, %v682, %v1600
        %v1614 = vld [vmem:[%s15] sm:$0xff]
        %v1616 = vsel %vm794, %v1613, 0
        %1618 = vmatprep.subr.mxu0 0.0
        %1619 = vmatpush1.msra.mxu0 0.0
        %1620 = vmatprep.subr.mxu0 0.0
        %1621 = vmatpush1.msra.mxu0 0.0
        %1622 = vmatprep.subr.mxu0 0.0
        %1623 = vmatpush1.msra.mxu0 0.0
        %1624 = vmatprep.subr.mxu0 0.0
        %1625 = vmatpush1.msra.mxu0 0.0
        %1626 = vmatprep.subr.mxu0 0.0
        %1627 = vmatpush1.msra.mxu0 0.0
        %1628 = vmatprep.subr.mxu0 0.0
        %1629 = vmatpush1.msra.mxu0 0.0
        %1630 = vmatprep.subr.mxu0 0.0
        %1631 = vmatpush1.msra.mxu0 0.0
        %1632 = vmatprep.subr.mxu0 0.0
        %1633 = vmatpush1.msra.mxu0 0.0
        %1634 = vmatprep.subr.mxu0 0.0
        %1635 = vmatpush1.msra.mxu0 0.0
        %1636 = vmatprep.subr.mxu0 0.0
        %1637 = vmatpush1.msra.mxu0 0.0
        %1638 = vmatprep.subr.mxu0 0.0
        %1639 = vmatpush1.msra.mxu0 0.0
        %1640 = vmatprep.subr.mxu0 0.0
        %1641 = vmatpush1.msra.mxu0 0.0
        %1642 = vmatprep.subr.mxu0 0.0
        %1643 = vmatpush1.msra.mxu0 0.0
        %1644 = vmatprep.subr.mxu0 0.0
        %1645 = vmatpush1.msra.mxu0 0.0
        %1646 = vmatprep.subr.mxu0 0.0
        %1647 = vmatpush1.msra.mxu0 0.0
        %1648 = vmatprep.subr.mxu0 0.0
        %1649 = vmatpush1.msra.mxu0 %v1614
        %1650 = vmatprep.subr.mxu0 0.0
        %1651 = vmatpush2.msra.mxu0 0.0
        %1652 = vmatprep.subr.mxu0 0.0
        %1653 = vmatpush2.msra.mxu0 0.0
        %1654 = vmatprep.subr.mxu0 0.0
        %1655 = vmatpush2.msra.mxu0 0.0
        %1656 = vmatprep.subr.mxu0 0.0
        %1657 = vmatpush2.msra.mxu0 0.0
        %1658 = vmatprep.subr.mxu0 0.0
        %1659 = vmatpush2.msra.mxu0 0.0
        %1660 = vmatprep.subr.mxu0 0.0
        %1661 = vmatpush2.msra.mxu0 0.0
        %1662 = vmatprep.subr.mxu0 0.0
        %1663 = vmatpush2.msra.mxu0 0.0
        %1664 = vmatprep.subr.mxu0 0.0
        %1665 = vmatpush2.msra.mxu0 0.0
        %1666 = vmatprep.subr.mxu0 0.0
        %1667 = vmatpush2.msra.mxu0 0.0
        %1668 = vmatprep.subr.mxu0 0.0
        %1669 = vmatpush2.msra.mxu0 0.0
        %1670 = vmatprep.subr.mxu0 0.0
        %1671 = vmatpush2.msra.mxu0 0.0
        %1672 = vmatprep.subr.mxu0 0.0
        %1673 = vmatpush2.msra.mxu0 0.0
        %1674 = vmatprep.subr.mxu0 0.0
        %1675 = vmatpush2.msra.mxu0 0.0
        %1676 = vmatprep.subr.mxu0 0.0
        %1677 = vmatpush2.msra.mxu0 0.0
        %1678 = vmatprep.subr.mxu0 0.0
        %1679 = vmatpush2.msra.mxu0 0.0
        %1680 = vmatprep.subr.mxu0 0.0
        %1681 = vmatpush2.msra.mxu0 0.0
        %1682 = vmatprep.mubr.f32.mxu0 0.0
        %1683 = vmatmul.mubr.f32.gmra.mxu0 %v1616
        %v1684 = vpop.f32.mrf.mxu0
        %v1685 = vadd.f32 0.0, %v1684
        %v1686 = vpop.f32.mrf.mxu0
        %1687 = vdwg.mxu0
        %v1688 = vld [vmem:[%s16 + $0xb] sm:$0x1]
        %v1689 = vlaneseq
        %v1690 = vshrl.u32 %v1689, 7
        %v1691 = vsub.s32 0, %v1690
        %v1692 = vrot.slane %v1688, %v1691
        %v1693 = vadd.f32 %v1685, %v1692
        %v1694 = vmax.f32 %v1693, 0.0
        %v1695 = vsel %vm1062, %v1694, -inf
        %1696 = vmax.xlane.f32.xlu0 %v1695
        %v1697 = vpop.xlane.xlu0 %1696
        %v1698 = vsub.f32 %v1694, %v1697
        %v1699 = vmul.f32 %v1698, 1.442695
        %v1700 = vpow.pop %v1699
        %v1701 = vsel %vm1062, %v1700, 0.0
        %1702 = vadd.xlane.f32.xlu0 %v1701
        %v1703 = vpop.xlane.xlu0 %1702
        %v1704 = vrcp.pop %v1703
        %v1705 = vmul.f32 %v1700, %v1704
        %v1708 = vcombine.low %v1405, %v1406
        %v1710 = vunpack.c.l.s4 1966171168
        %v1711 = vunpack.c.0.s8 %v1710
        %v1712 = vlaneseq
        %v1713 = vshrl.u32 %v1712, 7
        %v1714 = vsub.s32 %v1711, %v1713
        %v1715 = vrot.slane %v1708, %v1714
        %v1717 = vunpack.c.l.s4 1966171168
        %v1718 = vunpack.c.0.s8 %v1717
        %v1719 = vlaneseq
        %v1720 = vshrl.u32 %v1719, 7
        %v1721 = vsub.s32 %v1718, %v1720
        %v1722 = vrot.slane %v1715, %v1721
        %v1724 = vlaneseq
        %vm1725 = vcmp.ge.s32.totalorder %v1724, 0
        %vm1726 = vcmp.lt.s32.totalorder %v1724, 256
        %vm1727 = vmand %vm1725, %vm1726
        %1728 = vst.msk [vmem:[%s643] sm:$0x3] %vm1727, %v1722
        %v1729 = vmul.f32 %v1612, %v682
        %v1730 = vsub.f32 1.0, %v1612
        %v1731 = vmul.f32 %v1730, %v1705
        %v1732 = vadd.f32 %v1729, %v1731
        %1733 = vst.msk [vmem:[%s680] sm:$0xff] %vm1062, %v1732
        %s1734 = sand.u32 %s433, 1
        %s1735 = scalar_lea.sflag [#allocation3], %s1734
        %s1736 = sand.u32 %s433, 1
        %s1737 = smul.addr %s1736, 2
        %s1738 = scalar_lea.vmem [#allocation2], %s1737
        %p1739 = scmp.lt.s32.totalorder %s33, 1
        %s1740 = scalar_select %p1739, %s33, 1
        %s1741 = smul.addr %s1740, 8
        %s1742 = scalar_lea.vmem %s18, %s1741
        // Predicated region
        $region89: #{tpu_custom_call.1} parent=87 // pred_check
          %p1743 = pneg %p443
        $region90: #{tpu_custom_call.1} parent=87 // pred_check_branch
          %1745 = sbr.rel (%p1743) target = $region92
        $region91: #{tpu_custom_call.1} parent=87 // pred_region
          %s1747 = ssub.s32 32, 32
          %1748 = vsyncadd %s1735, %s1747
          %s1749 = smul.addr %s33, 2
          %s1750 = smul.addr %s1749, 16
          %s1751 = scalar_lea.hbm %s17, %s1750
          %s1753 = sshll.u32 %s1738, 4
          %s1754 = int_to_ptr.vmem [resolvable:$true] %s1753
          %1756 = dma.vmem_to_hbm [thread:$0]  %s1754, 32, %s1751, %s1735
        $region92: #{tpu_custom_call.1} parent=87 // pred_fallthru
          _
        // Predicated region
        $region93: #{tpu_custom_call.1} parent=87 // pred_check
          %p1757 = pneg %p469
        $region94: #{tpu_custom_call.1} parent=87 // pred_check_branch
          %1759 = sbr.rel (%p1757) target = $region96
        $region95: #{tpu_custom_call.1} parent=87 // pred_region
          _
        $region96: #{tpu_custom_call.1} parent=87 // pred_fallthru
          _
      $region88: #{tpu_custom_call.1} parent=5 // pred_fallthru
        _
      %p1760 = scmp.le.s32.totalorder 2, %s28
      // Predicated region
      $region97: #{tpu_custom_call.1} parent=5 // pred_check
        %p1761 = pneg %p1760
      $region98: #{tpu_custom_call.1} parent=5 // pred_check_branch
        %1763 = sbr.rel (%p1761) target = $region100
      $region99: #{tpu_custom_call.1} parent=5 // pred_region
        %s1764 = ssub.s32 %s28, 2
        // Predicated region
        $region101: #{tpu_custom_call.1} parent=99 // pred_check
          %p1765 = pneg %p449
        $region102: #{tpu_custom_call.1} parent=99 // pred_check_branch
          %1767 = sbr.rel (%p1765) target = $region104
        $region103: #{tpu_custom_call.1} parent=99 // pred_region
          %s1768 = sand.u32 %s434, 1
          %s1769 = scalar_lea.sflag [#allocation3], %s1768
          %s1770 = sand.u32 %s434, 1
          %s1771 = smul.addr %s1770, 2
          %s1772 = scalar_lea.vmem [#allocation2], %s1771
          %1773 = dma.done %s1769, 32
        $region104: #{tpu_custom_call.1} parent=99 // pred_fallthru
          _
        // Predicated region
        $region105: #{tpu_custom_call.1} parent=99 // pred_check
          %p1774 = pneg %p475
        $region106: #{tpu_custom_call.1} parent=99 // pred_check_branch
          %1776 = sbr.rel (%p1774) target = $region108
        $region107: #{tpu_custom_call.1} parent=99 // pred_region
          %p1777 = scmp.lt.s32.totalorder %s34, 1
          %s1778 = scalar_select %p1777, %s34, 1
          %s1779 = smul.addr %s1778, 8
          %s1780 = scalar_lea.vmem %s18, %s1779
        $region108: #{tpu_custom_call.1} parent=99 // pred_fallthru
          _
      $region100: #{tpu_custom_call.1} parent=5 // pred_fallthru
        _
    $region6: #{tpu_custom_call.1} parent=1 // loop_footer
      %s32 = sadd.s32 1, %s28
    $region7: #{tpu_custom_call.1} parent=1 // loop_footer_branch
      %27 = sbr.rel target = $region3
    $region8: #{tpu_custom_call.1} parent=1 // loop_exit
      _
    %1781 = vsyncpa [#allocation3], 1
    %s1782 = scalar_lea.sflag [#allocation3], 1
    %1783 = vsyncpa %s1782, 1

</llo_original>
